<compile_context>
chip_gen: v5e
topology: v5e:2x2
jax: 0.10.0
libtpu: 0.0.40
codegen_flags: <defaults>
</compile_context>

<pallas_src>
import functools
import numpy as np
import jax
import jax.numpy as jnp
from jax import lax
from jax.experimental import pallas as pl
from jax.experimental.pallas import tpu as pltpu

F32 = jnp.float32
VMEM_LIMIT = 32 * 1024 * 1024          # raise scoped VMEM (v5e default is 16 MiB)
NEG_INF = -1e9                         # bias for padded logit lanes


# ----------------------------------------------------------------------------
# small in-kernel math helpers
# ----------------------------------------------------------------------------
def _gelu(x):
    # NOTE: tanh-approx GELU (nn.GELU default is erf-based; ~1e-3 deviation).
    c = jnp.float32(0.7978845608028654)  # sqrt(2/pi)
    return 0.5 * x * (1.0 + jnp.tanh(c * (x + 0.044715 * x * x * x)))


def _sigmoid(x):
    # 1/(1+exp(-x)) with the reciprocal on the (otherwise idle) EUP slot.
    return pl.reciprocal(1.0 + jnp.exp(-x), approx=True)


def _shift_down(h):
    # out[t] = h[t-1], out[0] = 0   (zero-padded "previous timestep")
    z = jnp.zeros((1, h.shape[1]), h.dtype)
    return jnp.concatenate([z, h[:-1, :]], axis=0)


def _shift_up(h):
    # out[t] = h[t+1], out[T-1] = 0 (zero-padded "next timestep")
    z = jnp.zeros((1, h.shape[1]), h.dtype)
    return jnp.concatenate([h[1:, :], z], axis=0)


def _row_tile(n, target=512):
    # biggest row block (<= target) that tiles n exactly (prefers multiples of 8)
    if n <= target:
        return n
    for d in range(target, 7, -1):
        if n % d == 0 and d % 8 == 0:
            return d
    return n


# ----------------------------------------------------------------------------
# CNN embedding kernel  (8 conv blocks, BN folded, GELU where present)
# ----------------------------------------------------------------------------
def cnn_kernel(x_ref, *refs, cfg):
    out_ref = refs[-1]
    prefs = refs[:-1]
    h = x_ref[...]                                   # (T, Cin) for one batch item
    for i, (k, act) in enumerate(cfg):
        w = prefs[2 * i][...]                        # (k, Cin_i, Cout_i) dense taps
        b = prefs[2 * i + 1][...]                    # (1, Cout_i)
        y = jnp.dot(h, w[k // 2], preferred_element_type=F32) + b      # center tap
        if k == 3:
            # +/-1 time shifts as cheap static-slice shifts (no (T,T) matmuls).
            y = (y
                 + jnp.dot(_shift_down(h), w[0], preferred_element_type=F32)
                 + jnp.dot(_shift_up(h),   w[2], preferred_element_type=F32))
        h = _gelu(y) if act else y
    out_ref[...] = h


def cnn_embedding(x, cnn_params, cnn_cfg):
    # x: (B, T, Cin) -> (B, T, channels[3])
    B, T, Cin = x.shape
    Cout = cnn_params[-1][0].shape[-1]
    vmem = pl.BlockSpec(memory_space=pltpu.MemorySpace.VMEM)
    flat = []
    in_specs = [pl.BlockSpec((None, T, Cin), lambda b: (b, 0, 0))]
    for (w, bias) in cnn_params:
        flat += [w, bias]
        in_specs += [vmem, vmem]          # weights resident in VMEM, DMA'd once
    kern = functools.partial(cnn_kernel, cfg=tuple(cnn_cfg))
    # TODO(synk): pad Cout of the last block to a 128-lane multiple for
    #   unmasked stores at production channel counts.
    return pl.pallas_call(
        kern,
        out_shape=jax.ShapeDtypeStruct((B, T, Cout), F32),
        grid=(B,),
        in_specs=in_specs,
        out_specs=pl.BlockSpec((None, T, Cout), lambda b: (b, 0, 0)),
        compiler_params=pltpu.CompilerParams(
            dimension_semantics=("parallel",), vmem_limit_bytes=VMEM_LIMIT),
    )(x, *flat)


# ----------------------------------------------------------------------------
# BiLSTM: (a) hoisted input projection for both directions, one big matmul
# ----------------------------------------------------------------------------
def gateproj_kernel(x_ref, wf_ref, bf_ref, wb_ref, bb_ref, gf_ref, gb_ref):
    x = x_ref[...]                                              # (RT, Din)
    gf_ref[...] = jnp.dot(x, wf_ref[...], preferred_element_type=F32) + bf_ref[...]
    gb_ref[...] = jnp.dot(x, wb_ref[...], preferred_element_type=F32) + bb_ref[...]


def gate_projection(x2d, wih_f, b_f, wih_b, b_b):
    # x2d: (T*B, Din) -> (T*B, 4H) per direction (x @ W_ih + b, no recurrence)
    N, Din = x2d.shape
    H4 = wih_f.shape[-1]
    RT = _row_tile(N)
    vmem = pl.BlockSpec(memory_space=pltpu.MemorySpace.VMEM)
    return pl.pallas_call(
        gateproj_kernel,
        out_shape=(jax.ShapeDtypeStruct((N, H4), F32),
                   jax.ShapeDtypeStruct((N, H4), F32)),
        grid=(N // RT,),
        in_specs=[pl.BlockSpec((RT, Din), lambda i: (i, 0)),
                  vmem, vmem, vmem, vmem],
        out_specs=(pl.BlockSpec((RT, H4), lambda i: (i, 0)),
                   pl.BlockSpec((RT, H4), lambda i: (i, 0))),
        compiler_params=pltpu.CompilerParams(
            dimension_semantics=("parallel",), vmem_limit_bytes=VMEM_LIMIT),
    )(x2d, wih_f, b_f, wih_b, b_b)


# ----------------------------------------------------------------------------
# BiLSTM: (b) fused fwd+bwd recurrence (h @ W_hh + gate nonlinearity only)
# ----------------------------------------------------------------------------
def bilstm_rec_kernel(gf_ref, gb_ref, len_ref, whf_ref, whb_ref, y_ref):
    T, B, _ = gf_ref.shape
    H = whf_ref.shape[0]
    whf = whf_ref[...]               # (H, 4H)
    whb = whb_ref[...]               # (H, 4H)
    lens = len_ref[...]              # (B, 1) int32

    def cell(gates, c):
        i_g = _sigmoid(gates[:, 0:H])
        f_g = _sigmoid(gates[:, H:2 * H])
        g_g = jnp.tanh(gates[:, 2 * H:3 * H])
        o_g = _sigmoid(gates[:, 3 * H:4 * H])
        c_new = f_g * c + i_g * g_g
        h_new = o_g * jnp.tanh(c_new)
        return h_new, c_new

    def step(i, carry):
        hf, cf, hb, cb = carry
        tf = i
        tb = T - 1 - i
        gates_f = gf_ref[tf] + jnp.dot(hf, whf, preferred_element_type=F32)
        gates_b = gb_ref[tb] + jnp.dot(hb, whb, preferred_element_type=F32)
        hf_new, cf_new = cell(gates_f, cf)
        hb_new, cb_new = cell(gates_b, cb)
        vf = tf < lens               # (B,1) masks reproduce pack/pad semantics
        vb = tb < lens
        y_ref[tf, :, pl.ds(0, H)] = jnp.where(vf, hf_new, 0.0)
        y_ref[tb, :, pl.ds(H, H)] = jnp.where(vb, hb_new, 0.0)
        return (jnp.where(vf, hf_new, hf), jnp.where(vf, cf_new, cf),
                jnp.where(vb, hb_new, hb), jnp.where(vb, cb_new, cb))

    z = jnp.zeros((B, H), F32)
    lax.fori_loop(0, T, step, (z, z, z, z))


def bilstm_recurrence(gf, gb, lens, whh_f, whh_b):
    # gf/gb: (T, B, 4H) precomputed gates -> y: (T, B, 2H)
    T, B, _ = gf.shape
    H = whh_f.shape[0]
    vmem = pl.BlockSpec(memory_space=pltpu.MemorySpace.VMEM)
    # TODO(synk): chunk over T with manual double-buffered DMA for sequence
    #   lengths whose gate buffers exceed the VMEM budget (v7x: 64 MiB).
    return pl.pallas_call(
        bilstm_rec_kernel,
        out_shape=jax.ShapeDtypeStruct((T, B, 2 * H), F32),
        in_specs=[vmem] * 5,
        out_specs=vmem,
        compiler_params=pltpu.CompilerParams(vmem_limit_bytes=VMEM_LIMIT),
    )(gf, gb, lens, whh_f, whh_b)


# ----------------------------------------------------------------------------
# Classification head + log-softmax kernel (row-tiled over T*B, 128-lane pad)
# ----------------------------------------------------------------------------
def cls_kernel(x_ref, w1_ref, b1_ref, w2_ref, b2_ref, o_ref):
    x = x_ref[...]                                                # (RT, 2H)
    h = _gelu(jnp.dot(x, w1_ref[...], preferred_element_type=F32) + b1_ref[...])
    # Dropout(p) is identity in inference mode.
    logits = jnp.dot(h, w2_ref[...], preferred_element_type=F32) + b2_ref[...]
    m = jnp.max(logits, axis=-1, keepdims=True)
    s = logits - m
    lse = jnp.log(jnp.sum(jnp.exp(s), axis=-1, keepdims=True))
    o_ref[...] = s - lse                                          # log-softmax


def classification(x2d, w1, b1, w2, b2):
    # x2d: (T*B, 2H) -> (T*B, out_size)
    N, D = x2d.shape
    O = w2.shape[-1]
    Opad = ((O + 127) // 128) * 128
    if Opad != O:
        # lane-dense output: zero weight columns + -1e9 bias make padded
        # logits vanish under softmax; sliced off below.
        w2 = jnp.pad(w2, ((0, 0), (0, Opad - O)))
        b2 = jnp.pad(b2, ((0, 0), (0, Opad - O)), constant_values=NEG_INF)
    RT = _row_tile(N)
    vmem = pl.BlockSpec(memory_space=pltpu.MemorySpace.VMEM)
    out = pl.pallas_call(
        cls_kernel,
        out_shape=jax.ShapeDtypeStruct((N, Opad), F32),
        grid=(N // RT,),
        in_specs=[pl.BlockSpec((RT, D), lambda i: (i, 0)),
                  vmem, vmem, vmem, vmem],
        out_specs=pl.BlockSpec((RT, Opad), lambda i: (i, 0)),
        compiler_params=pltpu.CompilerParams(
            dimension_semantics=("parallel",), vmem_limit_bytes=VMEM_LIMIT),
    )(x2d, w1, b1, w2, b2)
    return out[:, :O]


# ----------------------------------------------------------------------------
# Parameter setup (deterministic, in-script)
# ----------------------------------------------------------------------------
def dense_conv_taps(weight, groups):
    # weight: (Cout, Cin//groups, K) PyTorch Conv1d layout
    # -> dense (K, Cin, Cout) taps (K=3: x[t-1], x[t], x[t+1]; K=1: center);
    #    group / depthwise structure encoded as zero blocks.
    w = np.asarray(weight)
    Cout, Cin_g, K = w.shape
    Cin = Cin_g * groups
    cout_g = Cout // groups
    dense = np.zeros((K, Cin, Cout), np.float32)
    for g in range(groups):
        for k in range(K):
            dense[k, g * Cin_g:(g + 1) * Cin_g, g * cout_g:(g + 1) * cout_g] = \
                w[g * cout_g:(g + 1) * cout_g, :, k].T
    return jnp.asarray(dense)


def init_params(key, in_channels, channels, hidden_dim, num_layers, out_size):
    keys = iter(jax.random.split(key, 128))

    def nrm(shape, s=0.2):
        return jax.random.normal(next(keys), shape, F32) * s

    C0, C1, C2, C3 = channels
    eps = 1e-5
    conv_cfg = [
        # (Cout, Cin, K, groups, has_bn, has_gelu)
        (in_channels, in_channels, 3, in_channels, True,  False),  # depthwise + BN
        (C0, in_channels, 1, 1, False, True),                      # pointwise + GELU
        (C0, C0, 3, 2, True,  False),                              # grouped + BN
        (C1, C0, 1, 1, False, True),                               # pointwise + GELU
        (C1, C1, 3, 2, True,  False),                              # grouped + BN
        (C2, C1, 1, 1, False, True),                               # pointwise + GELU
        (C2, C2, 3, 2, True,  False),                              # grouped + BN
        (C3, C2, 3, 1, False, True),                               # full k3 + GELU
    ]
    cnn_params, cnn_cfg = [], []
    for (cout, cin, k, g, has_bn, has_act) in conv_cfg:
        w = nrm((cout, cin // g, k))
        b = nrm((cout,), 0.1)
        dense = dense_conv_taps(w, g)
        if has_bn:
            gamma = 1.0 + nrm((cout,), 0.1)
            beta = nrm((cout,), 0.1)
            scale = gamma / jnp.sqrt(1.0 + eps)     # eval-mode BN: mean=0, var=1
            dense = dense * scale[None, None, :]
            b = b * scale + beta
        cnn_params.append((dense, b.reshape(1, cout)))
        cnn_cfg.append((k, has_act))

    lstm_params = []
    din = C3
    H = hidden_dim
    for _ in range(num_layers):
        layer = {}
        for d in ("fwd", "bwd"):
            layer[d] = (nrm((din, 4 * H)),          # W_ih^T
                        nrm((H, 4 * H)),            # W_hh^T
                        nrm((1, 4 * H), 0.1))       # b_ih + b_hh
        lstm_params.append(layer)
        din = 2 * H

    cls_params = (nrm((2 * H, 4 * H)), nrm((1, 4 * H), 0.1),
                  nrm((4 * H, out_size)), nrm((1, out_size), 0.1))
    return (cnn_params, tuple(cnn_cfg)), lstm_params, cls_params


# ----------------------------------------------------------------------------
# Full forward pass
# ----------------------------------------------------------------------------
def cnn_bilstm_forward(x, lx, params):
    # x: (B, T, in_channels) float32, lx: host numpy int lengths (B,)
    (cnn_params, cnn_cfg), lstm_params, cls_params = params
    B, T, _ = x.shape

    emb = cnn_embedding(x, cnn_params, cnn_cfg)            # (B, T, C3)

    lens = jnp.asarray(np.asarray(lx).reshape(-1, 1), jnp.int32)
    h = jnp.transpose(emb, (1, 0, 2))                      # (T, B, C3) time-major
    # TODO(synk): fold this single layout change into the CNN out_spec once a
    #   (T, 1, C)-per-batch output block is expressible for this B.

    for layer in lstm_params:
        din = h.shape[-1]
        wih_f, whh_f, b_f = layer["fwd"]
        wih_b, whh_b, b_b = layer["bwd"]
        # Hoisted input projection for BOTH directions: one big MXU matmul.
        gf2d, gb2d = gate_projection(h.reshape(T * B, din), wih_f, b_f, wih_b, b_b)
        h4 = gf2d.shape[-1]
        h = bilstm_recurrence(gf2d.reshape(T, B, h4),
                              gb2d.reshape(T, B, h4),
                              lens, whh_f, whh_b)          # (T, B, 2H)
        # inter-layer Dropout is identity in inference mode

    t_max = int(np.max(np.asarray(lx)))                    # pad_packed truncates
    scores = classification(h.reshape(T * B, h.shape[-1]), *cls_params)
    tag_scores = jnp.transpose(scores.reshape(T, B, -1), (1, 0, 2))[:, :t_max, :]
    out_lengths = jnp.asarray(np.asarray(lx), jnp.int32)
    return tag_scores, out_lengths


if __name__ == "__main__":
    B, T = 2, 16
    in_channels = 4
    channels = [8, 16, 16, 32]
    hidden_dim = 16
    num_layers = 2
    out_size = 8

    x = jax.random.normal(jax.random.PRNGKey(0), (B, T, in_channels), F32)
    lx = np.array([16, 12], np.int32)

    params = init_params(jax.random.PRNGKey(42), in_channels, channels,
                         hidden_dim, num_layers, out_size)

    tag_scores, out_lengths = cnn_bilstm_forward(x, lx, params)
    jax.block_until_ready(tag_scores)

    assert tag_scores.shape == (B, int(lx.max()), out_size)
    assert out_lengths.shape == (B,)
    assert np.all(np.isfinite(np.asarray(tag_scores)))
    # log-softmax sanity: rows exponentiate to a probability distribution
    assert np.allclose(np.exp(np.asarray(tag_scores)).sum(-1), 1.0, atol=1e-4)
    print("KERNEL_OK")
</pallas_src>

<mosaic_0001>
module attributes {stable_mosaic.version = 11 : i64} {
  func.func @cnn_kernel(%arg0: i32, %arg1: memref<1x16x4xf32, #tpu.memory_space<vmem>>, %arg2: memref<3x4x4xf32, #tpu.memory_space<vmem>>, %arg3: memref<1x4xf32, #tpu.memory_space<vmem>>, %arg4: memref<1x4x8xf32, #tpu.memory_space<vmem>>, %arg5: memref<1x8xf32, #tpu.memory_space<vmem>>, %arg6: memref<3x8x8xf32, #tpu.memory_space<vmem>>, %arg7: memref<1x8xf32, #tpu.memory_space<vmem>>, %arg8: memref<1x8x16xf32, #tpu.memory_space<vmem>>, %arg9: memref<1x16xf32, #tpu.memory_space<vmem>>, %arg10: memref<3x16x16xf32, #tpu.memory_space<vmem>>, %arg11: memref<1x16xf32, #tpu.memory_space<vmem>>, %arg12: memref<1x16x16xf32, #tpu.memory_space<vmem>>, %arg13: memref<1x16xf32, #tpu.memory_space<vmem>>, %arg14: memref<3x16x16xf32, #tpu.memory_space<vmem>>, %arg15: memref<1x16xf32, #tpu.memory_space<vmem>>, %arg16: memref<3x16x32xf32, #tpu.memory_space<vmem>>, %arg17: memref<1x32xf32, #tpu.memory_space<vmem>>, %arg18: memref<1x16x32xf32, #tpu.memory_space<vmem>>) attributes {dimension_semantics = [#tpu.dimension_semantics<parallel>], iteration_bounds = array<i64: 2>, scalar_prefetch = 0 : i64, scratch_operands = 0 : i64, tpu.core_type = #tpu.core_type<tc>, window_params = [{transform_indices = @transform_0, window_bounds = array<i64: 1, 16, 4>}, {pipeline_mode = #tpu.pipeline_mode<synchronous>, transform_indices = @transform_1, window_bounds = array<i64: 3, 4, 4>}, {pipeline_mode = #tpu.pipeline_mode<synchronous>, transform_indices = @transform_2, window_bounds = array<i64: 1, 4>}, {pipeline_mode = #tpu.pipeline_mode<synchronous>, transform_indices = @transform_3, window_bounds = array<i64: 1, 4, 8>}, {pipeline_mode = #tpu.pipeline_mode<synchronous>, transform_indices = @transform_4, window_bounds = array<i64: 1, 8>}, {pipeline_mode = #tpu.pipeline_mode<synchronous>, transform_indices = @transform_5, window_bounds = array<i64: 3, 8, 8>}, {pipeline_mode = #tpu.pipeline_mode<synchronous>, transform_indices = @transform_6, window_bounds = array<i64: 1, 8>}, {pipeline_mode = #tpu.pipeline_mode<synchronous>, transform_indices = @transform_7, window_bounds = array<i64: 1, 8, 16>}, {pipeline_mode = #tpu.pipeline_mode<synchronous>, transform_indices = @transform_8, window_bounds = array<i64: 1, 16>}, {pipeline_mode = #tpu.pipeline_mode<synchronous>, transform_indices = @transform_9, window_bounds = array<i64: 3, 16, 16>}, {pipeline_mode = #tpu.pipeline_mode<synchronous>, transform_indices = @transform_10, window_bounds = array<i64: 1, 16>}, {pipeline_mode = #tpu.pipeline_mode<synchronous>, transform_indices = @transform_11, window_bounds = array<i64: 1, 16, 16>}, {pipeline_mode = #tpu.pipeline_mode<synchronous>, transform_indices = @transform_12, window_bounds = array<i64: 1, 16>}, {pipeline_mode = #tpu.pipeline_mode<synchronous>, transform_indices = @transform_13, window_bounds = array<i64: 3, 16, 16>}, {pipeline_mode = #tpu.pipeline_mode<synchronous>, transform_indices = @transform_14, window_bounds = array<i64: 1, 16>}, {pipeline_mode = #tpu.pipeline_mode<synchronous>, transform_indices = @transform_15, window_bounds = array<i64: 3, 16, 32>}, {pipeline_mode = #tpu.pipeline_mode<synchronous>, transform_indices = @transform_16, window_bounds = array<i64: 1, 32>}, {transform_indices = @transform_17, window_bounds = array<i64: 1, 16, 32>}]} {
    %c0 = arith.constant 0 : index
    %c0_0 = arith.constant 0 : index
    %c0_1 = arith.constant 0 : index
    %0 = vector.load %arg1[%c0, %c0_0, %c0_1] : memref<1x16x4xf32, #tpu.memory_space<vmem>>, vector<1x16x4xf32>
    %1 = vector.shape_cast %0 : vector<1x16x4xf32> to vector<16x4xf32>
    %c0_2 = arith.constant 0 : index
    %c0_3 = arith.constant 0 : index
    %c0_4 = arith.constant 0 : index
    %2 = vector.load %arg2[%c0_2, %c0_3, %c0_4] : memref<3x4x4xf32, #tpu.memory_space<vmem>>, vector<3x4x4xf32>
    %c0_5 = arith.constant 0 : index
    %c0_6 = arith.constant 0 : index
    %3 = vector.load %arg3[%c0_5, %c0_6] : memref<1x4xf32, #tpu.memory_space<vmem>>, vector<1x4xf32>
    %4 = vector.extract_strided_slice %2 {offsets = [1, 0, 0], sizes = [1, 4, 4], strides = [1, 1, 1]} : vector<3x4x4xf32> to vector<1x4x4xf32>
    %5 = vector.shape_cast %4 : vector<1x4x4xf32> to vector<4x4xf32>
    %cst = arith.constant dense<0.000000e+00> : vector<16x4xf32>
    %6 = tpu.matmul %1, %5, %cst {dimension_numbers = #tpu.dot_dimension_numbers<[1], [0], [0], [1], [0, 0, 1, 1], [], []>} : vector<16x4xf32>, vector<4x4xf32>, vector<16x4xf32> -> vector<16x4xf32>
    %7 = vector.broadcast %3 : vector<1x4xf32> to vector<16x4xf32>
    %8 = arith.addf %6, %7 : vector<16x4xf32>
    %cst_7 = arith.constant 0.000000e+00 : f32
    %9 = vector.broadcast %cst_7 : f32 to vector<1x4xf32>
    %10 = vector.extract_strided_slice %1 {offsets = [0, 0], sizes = [15, 4], strides = [1, 1]} : vector<16x4xf32> to vector<15x4xf32>
    %11 = tpu.concatenate %9, %10 in 0 : vector<1x4xf32>, vector<15x4xf32> -> vector<16x4xf32>
    %12 = vector.extract_strided_slice %2 {offsets = [0, 0, 0], sizes = [1, 4, 4], strides = [1, 1, 1]} : vector<3x4x4xf32> to vector<1x4x4xf32>
    %13 = vector.shape_cast %12 : vector<1x4x4xf32> to vector<4x4xf32>
    %cst_8 = arith.constant dense<0.000000e+00> : vector<16x4xf32>
    %14 = tpu.matmul %11, %13, %cst_8 {dimension_numbers = #tpu.dot_dimension_numbers<[1], [0], [0], [1], [0, 0, 1, 1], [], []>} : vector<16x4xf32>, vector<4x4xf32>, vector<16x4xf32> -> vector<16x4xf32>
    %15 = arith.addf %8, %14 : vector<16x4xf32>
    %cst_9 = arith.constant 0.000000e+00 : f32
    %16 = vector.broadcast %cst_9 : f32 to vector<1x4xf32>
    %17 = vector.extract_strided_slice %1 {offsets = [1, 0], sizes = [15, 4], strides = [1, 1]} : vector<16x4xf32> to vector<15x4xf32>
    %18 = tpu.concatenate %17, %16 in 0 : vector<15x4xf32>, vector<1x4xf32> -> vector<16x4xf32>
    %19 = vector.extract_strided_slice %2 {offsets = [2, 0, 0], sizes = [1, 4, 4], strides = [1, 1, 1]} : vector<3x4x4xf32> to vector<1x4x4xf32>
    %20 = vector.shape_cast %19 : vector<1x4x4xf32> to vector<4x4xf32>
    %cst_10 = arith.constant dense<0.000000e+00> : vector<16x4xf32>
    %21 = tpu.matmul %18, %20, %cst_10 {dimension_numbers = #tpu.dot_dimension_numbers<[1], [0], [0], [1], [0, 0, 1, 1], [], []>} : vector<16x4xf32>, vector<4x4xf32>, vector<16x4xf32> -> vector<16x4xf32>
    %22 = arith.addf %15, %21 : vector<16x4xf32>
    %c0_11 = arith.constant 0 : index
    %c0_12 = arith.constant 0 : index
    %c0_13 = arith.constant 0 : index
    %23 = vector.load %arg4[%c0_11, %c0_12, %c0_13] : memref<1x4x8xf32, #tpu.memory_space<vmem>>, vector<1x4x8xf32>
    %c0_14 = arith.constant 0 : index
    %c0_15 = arith.constant 0 : index
    %24 = vector.load %arg5[%c0_14, %c0_15] : memref<1x8xf32, #tpu.memory_space<vmem>>, vector<1x8xf32>
    %25 = vector.shape_cast %23 : vector<1x4x8xf32> to vector<4x8xf32>
    %cst_16 = arith.constant dense<0.000000e+00> : vector<16x8xf32>
    %26 = tpu.matmul %22, %25, %cst_16 {dimension_numbers = #tpu.dot_dimension_numbers<[1], [0], [0], [1], [0, 0, 1, 1], [], []>} : vector<16x4xf32>, vector<4x8xf32>, vector<16x8xf32> -> vector<16x8xf32>
    %27 = vector.broadcast %24 : vector<1x8xf32> to vector<16x8xf32>
    %28 = arith.addf %26, %27 : vector<16x8xf32>
    %cst_17 = arith.constant 5.000000e-01 : f32
    %29 = vector.broadcast %cst_17 : f32 to vector<16x8xf32>
    %30 = arith.mulf %29, %28 : vector<16x8xf32>
    %cst_18 = arith.constant 4.471500e-02 : f32
    %31 = vector.broadcast %cst_18 : f32 to vector<16x8xf32>
    %32 = arith.mulf %31, %28 : vector<16x8xf32>
    %33 = arith.mulf %32, %28 : vector<16x8xf32>
    %34 = arith.mulf %33, %28 : vector<16x8xf32>
    %35 = arith.addf %28, %34 : vector<16x8xf32>
    %cst_19 = arith.constant 0.797884583 : f32
    %36 = vector.broadcast %cst_19 : f32 to vector<16x8xf32>
    %37 = arith.mulf %36, %35 : vector<16x8xf32>
    %38 = math.tanh %37 : vector<16x8xf32>
    %cst_20 = arith.constant 1.000000e+00 : f32
    %39 = vector.broadcast %cst_20 : f32 to vector<16x8xf32>
    %40 = arith.addf %39, %38 : vector<16x8xf32>
    %41 = arith.mulf %30, %40 : vector<16x8xf32>
    %c0_21 = arith.constant 0 : index
    %c0_22 = arith.constant 0 : index
    %c0_23 = arith.constant 0 : index
    %42 = vector.load %arg6[%c0_21, %c0_22, %c0_23] : memref<3x8x8xf32, #tpu.memory_space<vmem>>, vector<3x8x8xf32>
    %c0_24 = arith.constant 0 : index
    %c0_25 = arith.constant 0 : index
    %43 = vector.load %arg7[%c0_24, %c0_25] : memref<1x8xf32, #tpu.memory_space<vmem>>, vector<1x8xf32>
    %44 = vector.extract_strided_slice %42 {offsets = [1, 0, 0], sizes = [1, 8, 8], strides = [1, 1, 1]} : vector<3x8x8xf32> to vector<1x8x8xf32>
    %45 = vector.shape_cast %44 : vector<1x8x8xf32> to vector<8x8xf32>
    %cst_26 = arith.constant dense<0.000000e+00> : vector<16x8xf32>
    %46 = tpu.matmul %41, %45, %cst_26 {dimension_numbers = #tpu.dot_dimension_numbers<[1], [0], [0], [1], [0, 0, 1, 1], [], []>} : vector<16x8xf32>, vector<8x8xf32>, vector<16x8xf32> -> vector<16x8xf32>
    %47 = vector.broadcast %43 : vector<1x8xf32> to vector<16x8xf32>
    %48 = arith.addf %46, %47 : vector<16x8xf32>
    %cst_27 = arith.constant 0.000000e+00 : f32
    %49 = vector.broadcast %cst_27 : f32 to vector<1x8xf32>
    %50 = vector.extract_strided_slice %41 {offsets = [0, 0], sizes = [15, 8], strides = [1, 1]} : vector<16x8xf32> to vector<15x8xf32>
    %51 = tpu.concatenate %49, %50 in 0 : vector<1x8xf32>, vector<15x8xf32> -> vector<16x8xf32>
    %52 = vector.extract_strided_slice %42 {offsets = [0, 0, 0], sizes = [1, 8, 8], strides = [1, 1, 1]} : vector<3x8x8xf32> to vector<1x8x8xf32>
    %53 = vector.shape_cast %52 : vector<1x8x8xf32> to vector<8x8xf32>
    %cst_28 = arith.constant dense<0.000000e+00> : vector<16x8xf32>
    %54 = tpu.matmul %51, %53, %cst_28 {dimension_numbers = #tpu.dot_dimension_numbers<[1], [0], [0], [1], [0, 0, 1, 1], [], []>} : vector<16x8xf32>, vector<8x8xf32>, vector<16x8xf32> -> vector<16x8xf32>
    %55 = arith.addf %48, %54 : vector<16x8xf32>
    %cst_29 = arith.constant 0.000000e+00 : f32
    %56 = vector.broadcast %cst_29 : f32 to vector<1x8xf32>
    %57 = vector.extract_strided_slice %41 {offsets = [1, 0], sizes = [15, 8], strides = [1, 1]} : vector<16x8xf32> to vector<15x8xf32>
    %58 = tpu.concatenate %57, %56 in 0 : vector<15x8xf32>, vector<1x8xf32> -> vector<16x8xf32>
    %59 = vector.extract_strided_slice %42 {offsets = [2, 0, 0], sizes = [1, 8, 8], strides = [1, 1, 1]} : vector<3x8x8xf32> to vector<1x8x8xf32>
    %60 = vector.shape_cast %59 : vector<1x8x8xf32> to vector<8x8xf32>
    %cst_30 = arith.constant dense<0.000000e+00> : vector<16x8xf32>
    %61 = tpu.matmul %58, %60, %cst_30 {dimension_numbers = #tpu.dot_dimension_numbers<[1], [0], [0], [1], [0, 0, 1, 1], [], []>} : vector<16x8xf32>, vector<8x8xf32>, vector<16x8xf32> -> vector<16x8xf32>
    %62 = arith.addf %55, %61 : vector<16x8xf32>
    %c0_31 = arith.constant 0 : index
    %c0_32 = arith.constant 0 : index
    %c0_33 = arith.constant 0 : index
    %63 = vector.load %arg8[%c0_31, %c0_32, %c0_33] : memref<1x8x16xf32, #tpu.memory_space<vmem>>, vector<1x8x16xf32>
    %c0_34 = arith.constant 0 : index
    %c0_35 = arith.constant 0 : index
    %64 = vector.load %arg9[%c0_34, %c0_35] : memref<1x16xf32, #tpu.memory_space<vmem>>, vector<1x16xf32>
    %65 = vector.shape_cast %63 : vector<1x8x16xf32> to vector<8x16xf32>
    %cst_36 = arith.constant dense<0.000000e+00> : vector<16x16xf32>
    %66 = tpu.matmul %62, %65, %cst_36 {dimension_numbers = #tpu.dot_dimension_numbers<[1], [0], [0], [1], [0, 0, 1, 1], [], []>} : vector<16x8xf32>, vector<8x16xf32>, vector<16x16xf32> -> vector<16x16xf32>
    %67 = vector.broadcast %64 : vector<1x16xf32> to vector<16x16xf32>
    %68 = arith.addf %66, %67 : vector<16x16xf32>
    %cst_37 = arith.constant 5.000000e-01 : f32
    %69 = vector.broadcast %cst_37 : f32 to vector<16x16xf32>
    %70 = arith.mulf %69, %68 : vector<16x16xf32>
    %cst_38 = arith.constant 4.471500e-02 : f32
    %71 = vector.broadcast %cst_38 : f32 to vector<16x16xf32>
    %72 = arith.mulf %71, %68 : vector<16x16xf32>
    %73 = arith.mulf %72, %68 : vector<16x16xf32>
    %74 = arith.mulf %73, %68 : vector<16x16xf32>
    %75 = arith.addf %68, %74 : vector<16x16xf32>
    %cst_39 = arith.constant 0.797884583 : f32
    %76 = vector.broadcast %cst_39 : f32 to vector<16x16xf32>
    %77 = arith.mulf %76, %75 : vector<16x16xf32>
    %78 = math.tanh %77 : vector<16x16xf32>
    %cst_40 = arith.constant 1.000000e+00 : f32
    %79 = vector.broadcast %cst_40 : f32 to vector<16x16xf32>
    %80 = arith.addf %79, %78 : vector<16x16xf32>
    %81 = arith.mulf %70, %80 : vector<16x16xf32>
    %c0_41 = arith.constant 0 : index
    %c0_42 = arith.constant 0 : index
    %c0_43 = arith.constant 0 : index
    %82 = vector.load %arg10[%c0_41, %c0_42, %c0_43] : memref<3x16x16xf32, #tpu.memory_space<vmem>>, vector<3x16x16xf32>
    %c0_44 = arith.constant 0 : index
    %c0_45 = arith.constant 0 : index
    %83 = vector.load %arg11[%c0_44, %c0_45] : memref<1x16xf32, #tpu.memory_space<vmem>>, vector<1x16xf32>
    %84 = vector.extract_strided_slice %82 {offsets = [1, 0, 0], sizes = [1, 16, 16], strides = [1, 1, 1]} : vector<3x16x16xf32> to vector<1x16x16xf32>
    %85 = vector.shape_cast %84 : vector<1x16x16xf32> to vector<16x16xf32>
    %cst_46 = arith.constant dense<0.000000e+00> : vector<16x16xf32>
    %86 = tpu.matmul %81, %85, %cst_46 {dimension_numbers = #tpu.dot_dimension_numbers<[1], [0], [0], [1], [0, 0, 1, 1], [], []>} : vector<16x16xf32>, vector<16x16xf32>, vector<16x16xf32> -> vector<16x16xf32>
    %87 = vector.broadcast %83 : vector<1x16xf32> to vector<16x16xf32>
    %88 = arith.addf %86, %87 : vector<16x16xf32>
    %cst_47 = arith.constant 0.000000e+00 : f32
    %89 = vector.broadcast %cst_47 : f32 to vector<1x16xf32>
    %90 = vector.extract_strided_slice %81 {offsets = [0, 0], sizes = [15, 16], strides = [1, 1]} : vector<16x16xf32> to vector<15x16xf32>
    %91 = tpu.concatenate %89, %90 in 0 : vector<1x16xf32>, vector<15x16xf32> -> vector<16x16xf32>
    %92 = vector.extract_strided_slice %82 {offsets = [0, 0, 0], sizes = [1, 16, 16], strides = [1, 1, 1]} : vector<3x16x16xf32> to vector<1x16x16xf32>
    %93 = vector.shape_cast %92 : vector<1x16x16xf32> to vector<16x16xf32>
    %cst_48 = arith.constant dense<0.000000e+00> : vector<16x16xf32>
    %94 = tpu.matmul %91, %93, %cst_48 {dimension_numbers = #tpu.dot_dimension_numbers<[1], [0], [0], [1], [0, 0, 1, 1], [], []>} : vector<16x16xf32>, vector<16x16xf32>, vector<16x16xf32> -> vector<16x16xf32>
    %95 = arith.addf %88, %94 : vector<16x16xf32>
    %cst_49 = arith.constant 0.000000e+00 : f32
    %96 = vector.broadcast %cst_49 : f32 to vector<1x16xf32>
    %97 = vector.extract_strided_slice %81 {offsets = [1, 0], sizes = [15, 16], strides = [1, 1]} : vector<16x16xf32> to vector<15x16xf32>
    %98 = tpu.concatenate %97, %96 in 0 : vector<15x16xf32>, vector<1x16xf32> -> vector<16x16xf32>
    %99 = vector.extract_strided_slice %82 {offsets = [2, 0, 0], sizes = [1, 16, 16], strides = [1, 1, 1]} : vector<3x16x16xf32> to vector<1x16x16xf32>
    %100 = vector.shape_cast %99 : vector<1x16x16xf32> to vector<16x16xf32>
    %cst_50 = arith.constant dense<0.000000e+00> : vector<16x16xf32>
    %101 = tpu.matmul %98, %100, %cst_50 {dimension_numbers = #tpu.dot_dimension_numbers<[1], [0], [0], [1], [0, 0, 1, 1], [], []>} : vector<16x16xf32>, vector<16x16xf32>, vector<16x16xf32> -> vector<16x16xf32>
    %102 = arith.addf %95, %101 : vector<16x16xf32>
    %c0_51 = arith.constant 0 : index
    %c0_52 = arith.constant 0 : index
    %c0_53 = arith.constant 0 : index
    %103 = vector.load %arg12[%c0_51, %c0_52, %c0_53] : memref<1x16x16xf32, #tpu.memory_space<vmem>>, vector<1x16x16xf32>
    %c0_54 = arith.constant 0 : index
    %c0_55 = arith.constant 0 : index
    %104 = vector.load %arg13[%c0_54, %c0_55] : memref<1x16xf32, #tpu.memory_space<vmem>>, vector<1x16xf32>
    %105 = vector.shape_cast %103 : vector<1x16x16xf32> to vector<16x16xf32>
    %cst_56 = arith.constant dense<0.000000e+00> : vector<16x16xf32>
    %106 = tpu.matmul %102, %105, %cst_56 {dimension_numbers = #tpu.dot_dimension_numbers<[1], [0], [0], [1], [0, 0, 1, 1], [], []>} : vector<16x16xf32>, vector<16x16xf32>, vector<16x16xf32> -> vector<16x16xf32>
    %107 = vector.broadcast %104 : vector<1x16xf32> to vector<16x16xf32>
    %108 = arith.addf %106, %107 : vector<16x16xf32>
    %cst_57 = arith.constant 5.000000e-01 : f32
    %109 = vector.broadcast %cst_57 : f32 to vector<16x16xf32>
    %110 = arith.mulf %109, %108 : vector<16x16xf32>
    %cst_58 = arith.constant 4.471500e-02 : f32
    %111 = vector.broadcast %cst_58 : f32 to vector<16x16xf32>
    %112 = arith.mulf %111, %108 : vector<16x16xf32>
    %113 = arith.mulf %112, %108 : vector<16x16xf32>
    %114 = arith.mulf %113, %108 : vector<16x16xf32>
    %115 = arith.addf %108, %114 : vector<16x16xf32>
    %cst_59 = arith.constant 0.797884583 : f32
    %116 = vector.broadcast %cst_59 : f32 to vector<16x16xf32>
    %117 = arith.mulf %116, %115 : vector<16x16xf32>
    %118 = math.tanh %117 : vector<16x16xf32>
    %cst_60 = arith.constant 1.000000e+00 : f32
    %119 = vector.broadcast %cst_60 : f32 to vector<16x16xf32>
    %120 = arith.addf %119, %118 : vector<16x16xf32>
    %121 = arith.mulf %110, %120 : vector<16x16xf32>
    %c0_61 = arith.constant 0 : index
    %c0_62 = arith.constant 0 : index
    %c0_63 = arith.constant 0 : index
    %122 = vector.load %arg14[%c0_61, %c0_62, %c0_63] : memref<3x16x16xf32, #tpu.memory_space<vmem>>, vector<3x16x16xf32>
    %c0_64 = arith.constant 0 : index
    %c0_65 = arith.constant 0 : index
    %123 = vector.load %arg15[%c0_64, %c0_65] : memref<1x16xf32, #tpu.memory_space<vmem>>, vector<1x16xf32>
    %124 = vector.extract_strided_slice %122 {offsets = [1, 0, 0], sizes = [1, 16, 16], strides = [1, 1, 1]} : vector<3x16x16xf32> to vector<1x16x16xf32>
    %125 = vector.shape_cast %124 : vector<1x16x16xf32> to vector<16x16xf32>
    %cst_66 = arith.constant dense<0.000000e+00> : vector<16x16xf32>
    %126 = tpu.matmul %121, %125, %cst_66 {dimension_numbers = #tpu.dot_dimension_numbers<[1], [0], [0], [1], [0, 0, 1, 1], [], []>} : vector<16x16xf32>, vector<16x16xf32>, vector<16x16xf32> -> vector<16x16xf32>
    %127 = vector.broadcast %123 : vector<1x16xf32> to vector<16x16xf32>
    %128 = arith.addf %126, %127 : vector<16x16xf32>
    %cst_67 = arith.constant 0.000000e+00 : f32
    %129 = vector.broadcast %cst_67 : f32 to vector<1x16xf32>
    %130 = vector.extract_strided_slice %121 {offsets = [0, 0], sizes = [15, 16], strides = [1, 1]} : vector<16x16xf32> to vector<15x16xf32>
    %131 = tpu.concatenate %129, %130 in 0 : vector<1x16xf32>, vector<15x16xf32> -> vector<16x16xf32>
    %132 = vector.extract_strided_slice %122 {offsets = [0, 0, 0], sizes = [1, 16, 16], strides = [1, 1, 1]} : vector<3x16x16xf32> to vector<1x16x16xf32>
    %133 = vector.shape_cast %132 : vector<1x16x16xf32> to vector<16x16xf32>
    %cst_68 = arith.constant dense<0.000000e+00> : vector<16x16xf32>
    %134 = tpu.matmul %131, %133, %cst_68 {dimension_numbers = #tpu.dot_dimension_numbers<[1], [0], [0], [1], [0, 0, 1, 1], [], []>} : vector<16x16xf32>, vector<16x16xf32>, vector<16x16xf32> -> vector<16x16xf32>
    %135 = arith.addf %128, %134 : vector<16x16xf32>
    %cst_69 = arith.constant 0.000000e+00 : f32
    %136 = vector.broadcast %cst_69 : f32 to vector<1x16xf32>
    %137 = vector.extract_strided_slice %121 {offsets = [1, 0], sizes = [15, 16], strides = [1, 1]} : vector<16x16xf32> to vector<15x16xf32>
    %138 = tpu.concatenate %137, %136 in 0 : vector<15x16xf32>, vector<1x16xf32> -> vector<16x16xf32>
    %139 = vector.extract_strided_slice %122 {offsets = [2, 0, 0], sizes = [1, 16, 16], strides = [1, 1, 1]} : vector<3x16x16xf32> to vector<1x16x16xf32>
    %140 = vector.shape_cast %139 : vector<1x16x16xf32> to vector<16x16xf32>
    %cst_70 = arith.constant dense<0.000000e+00> : vector<16x16xf32>
    %141 = tpu.matmul %138, %140, %cst_70 {dimension_numbers = #tpu.dot_dimension_numbers<[1], [0], [0], [1], [0, 0, 1, 1], [], []>} : vector<16x16xf32>, vector<16x16xf32>, vector<16x16xf32> -> vector<16x16xf32>
    %142 = arith.addf %135, %141 : vector<16x16xf32>
    %c0_71 = arith.constant 0 : index
    %c0_72 = arith.constant 0 : index
    %c0_73 = arith.constant 0 : index
    %143 = vector.load %arg16[%c0_71, %c0_72, %c0_73] : memref<3x16x32xf32, #tpu.memory_space<vmem>>, vector<3x16x32xf32>
    %c0_74 = arith.constant 0 : index
    %c0_75 = arith.constant 0 : index
    %144 = vector.load %arg17[%c0_74, %c0_75] : memref<1x32xf32, #tpu.memory_space<vmem>>, vector<1x32xf32>
    %145 = vector.extract_strided_slice %143 {offsets = [1, 0, 0], sizes = [1, 16, 32], strides = [1, 1, 1]} : vector<3x16x32xf32> to vector<1x16x32xf32>
    %146 = vector.shape_cast %145 : vector<1x16x32xf32> to vector<16x32xf32>
    %cst_76 = arith.constant dense<0.000000e+00> : vector<16x32xf32>
    %147 = tpu.matmul %142, %146, %cst_76 {dimension_numbers = #tpu.dot_dimension_numbers<[1], [0], [0], [1], [0, 0, 1, 1], [], []>} : vector<16x16xf32>, vector<16x32xf32>, vector<16x32xf32> -> vector<16x32xf32>
    %148 = vector.broadcast %144 : vector<1x32xf32> to vector<16x32xf32>
    %149 = arith.addf %147, %148 : vector<16x32xf32>
    %cst_77 = arith.constant 0.000000e+00 : f32
    %150 = vector.broadcast %cst_77 : f32 to vector<1x16xf32>
    %151 = vector.extract_strided_slice %142 {offsets = [0, 0], sizes = [15, 16], strides = [1, 1]} : vector<16x16xf32> to vector<15x16xf32>
    %152 = tpu.concatenate %150, %151 in 0 : vector<1x16xf32>, vector<15x16xf32> -> vector<16x16xf32>
    %153 = vector.extract_strided_slice %143 {offsets = [0, 0, 0], sizes = [1, 16, 32], strides = [1, 1, 1]} : vector<3x16x32xf32> to vector<1x16x32xf32>
    %154 = vector.shape_cast %153 : vector<1x16x32xf32> to vector<16x32xf32>
    %cst_78 = arith.constant dense<0.000000e+00> : vector<16x32xf32>
    %155 = tpu.matmul %152, %154, %cst_78 {dimension_numbers = #tpu.dot_dimension_numbers<[1], [0], [0], [1], [0, 0, 1, 1], [], []>} : vector<16x16xf32>, vector<16x32xf32>, vector<16x32xf32> -> vector<16x32xf32>
    %156 = arith.addf %149, %155 : vector<16x32xf32>
    %cst_79 = arith.constant 0.000000e+00 : f32
    %157 = vector.broadcast %cst_79 : f32 to vector<1x16xf32>
    %158 = vector.extract_strided_slice %142 {offsets = [1, 0], sizes = [15, 16], strides = [1, 1]} : vector<16x16xf32> to vector<15x16xf32>
    %159 = tpu.concatenate %158, %157 in 0 : vector<15x16xf32>, vector<1x16xf32> -> vector<16x16xf32>
    %160 = vector.extract_strided_slice %143 {offsets = [2, 0, 0], sizes = [1, 16, 32], strides = [1, 1, 1]} : vector<3x16x32xf32> to vector<1x16x32xf32>
    %161 = vector.shape_cast %160 : vector<1x16x32xf32> to vector<16x32xf32>
    %cst_80 = arith.constant dense<0.000000e+00> : vector<16x32xf32>
    %162 = tpu.matmul %159, %161, %cst_80 {dimension_numbers = #tpu.dot_dimension_numbers<[1], [0], [0], [1], [0, 0, 1, 1], [], []>} : vector<16x16xf32>, vector<16x32xf32>, vector<16x32xf32> -> vector<16x32xf32>
    %163 = arith.addf %156, %162 : vector<16x32xf32>
    %cst_81 = arith.constant 5.000000e-01 : f32
    %164 = vector.broadcast %cst_81 : f32 to vector<16x32xf32>
    %165 = arith.mulf %164, %163 : vector<16x32xf32>
    %cst_82 = arith.constant 4.471500e-02 : f32
    %166 = vector.broadcast %cst_82 : f32 to vector<16x32xf32>
    %167 = arith.mulf %166, %163 : vector<16x32xf32>
    %168 = arith.mulf %167, %163 : vector<16x32xf32>
    %169 = arith.mulf %168, %163 : vector<16x32xf32>
    %170 = arith.addf %163, %169 : vector<16x32xf32>
    %cst_83 = arith.constant 0.797884583 : f32
    %171 = vector.broadcast %cst_83 : f32 to vector<16x32xf32>
    %172 = arith.mulf %171, %170 : vector<16x32xf32>
    %173 = math.tanh %172 : vector<16x32xf32>
    %cst_84 = arith.constant 1.000000e+00 : f32
    %174 = vector.broadcast %cst_84 : f32 to vector<16x32xf32>
    %175 = arith.addf %174, %173 : vector<16x32xf32>
    %176 = arith.mulf %165, %175 : vector<16x32xf32>
    %c0_85 = arith.constant 0 : index
    %c0_86 = arith.constant 0 : index
    %c0_87 = arith.constant 0 : index
    %177 = vector.load %arg18[%c0_85, %c0_86, %c0_87] : memref<1x16x32xf32, #tpu.memory_space<vmem>>, vector<1x16x32xf32>
    %178 = vector.shape_cast %177 : vector<1x16x32xf32> to vector<16x32xf32>
    %179 = vector.shape_cast %176 : vector<16x32xf32> to vector<1x16x32xf32>
    tpu.vector_store %arg18[%c0_85, %c0_86, %c0_87], %179 {strides = array<i32>} : memref<1x16x32xf32, #tpu.memory_space<vmem>>, vector<1x16x32xf32>,
    return
  }
  func.func @transform_0(%arg0: i32) -> (i32, i32, i32) {
    %c0_i32 = arith.constant 0 : i32
    %c0_i32_0 = arith.constant 0 : i32
    %c0_i32_1 = arith.constant 0 : i32
    return %arg0, %c0_i32, %c0_i32_0 : i32, i32, i32
  }
  func.func @transform_1(%arg0: i32) -> (i32, i32, i32) {
    %c0_i32 = arith.constant 0 : i32
    %c0_i32_0 = arith.constant 0 : i32
    %c0_i32_1 = arith.constant 0 : i32
    %c0_i32_2 = arith.constant 0 : i32
    return %c0_i32, %c0_i32_0, %c0_i32_1 : i32, i32, i32
  }
  func.func @transform_2(%arg0: i32) -> (i32, i32) {
    %c0_i32 = arith.constant 0 : i32
    %c0_i32_0 = arith.constant 0 : i32
    %c0_i32_1 = arith.constant 0 : i32
    return %c0_i32, %c0_i32_0 : i32, i32
  }
  func.func @transform_3(%arg0: i32) -> (i32, i32, i32) {
    %c0_i32 = arith.constant 0 : i32
    %c0_i32_0 = arith.constant 0 : i32
    %c0_i32_1 = arith.constant 0 : i32
    %c0_i32_2 = arith.constant 0 : i32
    return %c0_i32, %c0_i32_0, %c0_i32_1 : i32, i32, i32
  }
  func.func @transform_4(%arg0: i32) -> (i32, i32) {
    %c0_i32 = arith.constant 0 : i32
    %c0_i32_0 = arith.constant 0 : i32
    %c0_i32_1 = arith.constant 0 : i32
    return %c0_i32, %c0_i32_0 : i32, i32
  }
  func.func @transform_5(%arg0: i32) -> (i32, i32, i32) {
    %c0_i32 = arith.constant 0 : i32
    %c0_i32_0 = arith.constant 0 : i32
    %c0_i32_1 = arith.constant 0 : i32
    %c0_i32_2 = arith.constant 0 : i32
    return %c0_i32, %c0_i32_0, %c0_i32_1 : i32, i32, i32
  }
  func.func @transform_6(%arg0: i32) -> (i32, i32) {
    %c0_i32 = arith.constant 0 : i32
    %c0_i32_0 = arith.constant 0 : i32
    %c0_i32_1 = arith.constant 0 : i32
    return %c0_i32, %c0_i32_0 : i32, i32
  }
  func.func @transform_7(%arg0: i32) -> (i32, i32, i32) {
    %c0_i32 = arith.constant 0 : i32
    %c0_i32_0 = arith.constant 0 : i32
    %c0_i32_1 = arith.constant 0 : i32
    %c0_i32_2 = arith.constant 0 : i32
    return %c0_i32, %c0_i32_0, %c0_i32_1 : i32, i32, i32
  }
  func.func @transform_8(%arg0: i32) -> (i32, i32) {
    %c0_i32 = arith.constant 0 : i32
    %c0_i32_0 = arith.constant 0 : i32
    %c0_i32_1 = arith.constant 0 : i32
    return %c0_i32, %c0_i32_0 : i32, i32
  }
  func.func @transform_9(%arg0: i32) -> (i32, i32, i32) {
    %c0_i32 = arith.constant 0 : i32
    %c0_i32_0 = arith.constant 0 : i32
    %c0_i32_1 = arith.constant 0 : i32
    %c0_i32_2 = arith.constant 0 : i32
    return %c0_i32, %c0_i32_0, %c0_i32_1 : i32, i32, i32
  }
  func.func @transform_10(%arg0: i32) -> (i32, i32) {
    %c0_i32 = arith.constant 0 : i32
    %c0_i32_0 = arith.constant 0 : i32
    %c0_i32_1 = arith.constant 0 : i32
    return %c0_i32, %c0_i32_0 : i32, i32
  }
  func.func @transform_11(%arg0: i32) -> (i32, i32, i32) {
    %c0_i32 = arith.constant 0 : i32
    %c0_i32_0 = arith.constant 0 : i32
    %c0_i32_1 = arith.constant 0 : i32
    %c0_i32_2 = arith.constant 0 : i32
    return %c0_i32, %c0_i32_0, %c0_i32_1 : i32, i32, i32
  }
  func.func @transform_12(%arg0: i32) -> (i32, i32) {
    %c0_i32 = arith.constant 0 : i32
    %c0_i32_0 = arith.constant 0 : i32
    %c0_i32_1 = arith.constant 0 : i32
    return %c0_i32, %c0_i32_0 : i32, i32
  }
  func.func @transform_13(%arg0: i32) -> (i32, i32, i32) {
    %c0_i32 = arith.constant 0 : i32
    %c0_i32_0 = arith.constant 0 : i32
    %c0_i32_1 = arith.constant 0 : i32
    %c0_i32_2 = arith.constant 0 : i32
    return %c0_i32, %c0_i32_0, %c0_i32_1 : i32, i32, i32
  }
  func.func @transform_14(%arg0: i32) -> (i32, i32) {
    %c0_i32 = arith.constant 0 : i32
    %c0_i32_0 = arith.constant 0 : i32
    %c0_i32_1 = arith.constant 0 : i32
    return %c0_i32, %c0_i32_0 : i32, i32
  }
  func.func @transform_15(%arg0: i32) -> (i32, i32, i32) {
    %c0_i32 = arith.constant 0 : i32
    %c0_i32_0 = arith.constant 0 : i32
    %c0_i32_1 = arith.constant 0 : i32
    %c0_i32_2 = arith.constant 0 : i32
    return %c0_i32, %c0_i32_0, %c0_i32_1 : i32, i32, i32
  }
  func.func @transform_16(%arg0: i32) -> (i32, i32) {
    %c0_i32 = arith.constant 0 : i32
    %c0_i32_0 = arith.constant 0 : i32
    %c0_i32_1 = arith.constant 0 : i32
    return %c0_i32, %c0_i32_0 : i32, i32
  }
  func.func @transform_17(%arg0: i32) -> (i32, i32, i32) {
    %c0_i32 = arith.constant 0 : i32
    %c0_i32_0 = arith.constant 0 : i32
    %c0_i32_1 = arith.constant 0 : i32
    return %arg0, %c0_i32, %c0_i32_0 : i32, i32, i32
  }
}

</mosaic_0001>

<llo_original>
// kernel: tpu_custom_call.1
$region0: #{tpu_custom_call.1}
  #allocation0 [shape = 'u32[]', space=smem, size = 0x4, offset = 0x4, fixed_abs, tag = 'smem constant byte address 0x4 - core index']
  #allocation1 [shape = 'u32[72,128]{1,0:T(1,128)}', space=vmem, size = 0x9000, scoped, tag = 'internal scratch']
  %s0 = inlined_call_operand.vmem [shape: f32[2,16,4], index: 0, kind: input, shape index: {}]
  %s1 = inlined_call_operand.hbm [shape: f32[3,4,4], index: 1, kind: input, shape index: {}]
  %s2 = inlined_call_operand.hbm [shape: f32[1,4], index: 2, kind: input, shape index: {}]
  %s3 = inlined_call_operand.hbm [shape: f32[1,4,8], index: 3, kind: input, shape index: {}]
  %s4 = inlined_call_operand.hbm [shape: f32[1,8], index: 4, kind: input, shape index: {}]
  %s5 = inlined_call_operand.hbm [shape: f32[3,8,8], index: 5, kind: input, shape index: {}]
  %s6 = inlined_call_operand.hbm [shape: f32[1,8], index: 6, kind: input, shape index: {}]
  %s7 = inlined_call_operand.hbm [shape: f32[1,8,16], index: 7, kind: input, shape index: {}]
  %s8 = inlined_call_operand.hbm [shape: f32[1,16], index: 8, kind: input, shape index: {}]
  %s9 = inlined_call_operand.vmem [shape: f32[3,16,16], index: 9, kind: input, shape index: {}]
  %s10 = inlined_call_operand.vmem [shape: f32[1,16], index: 10, kind: input, shape index: {}]
  %s11 = inlined_call_operand.hbm [shape: f32[1,16,16], index: 11, kind: input, shape index: {}]
  %s12 = inlined_call_operand.vmem [shape: f32[1,16], index: 12, kind: input, shape index: {}]
  %s13 = inlined_call_operand.hbm [shape: f32[3,16,16], index: 13, kind: input, shape index: {}]
  %s14 = inlined_call_operand.vmem [shape: f32[1,16], index: 14, kind: input, shape index: {}]
  %s15 = inlined_call_operand.hbm [shape: f32[3,16,32], index: 15, kind: input, shape index: {}]
  %s16 = inlined_call_operand.vmem [shape: f32[1,32], index: 16, kind: input, shape index: {}]
  %s17 = inlined_call_operand.hbm [shape: f32[2,16,32], index: 17, kind: output, shape index: {}]
  %s18 = sld [smem:[#allocation0]]
  $region145: #{tpu_custom_call.1} parent=0
    _
  %s20 = ssub.s32 1, %s18
  %s21 = scalar_select 0, %s20, %s18
  $region1: #{tpu_custom_call.1} parent=0
    #allocation2 [shape = 'u8[6144]{0}', space=vmem, size = 0x1800, scoped, tag = 'input window, operand 1, single buffered']
    #allocation3 [shape = 's32[2]{0}', space=sflag, size = 0x8, scoped, tag = 'scoped memory for tpu_custom_call.1']
    #allocation4 [shape = 's32[2]{0}', space=sflag, size = 0x8, scoped, tag = 'scoped memory for tpu_custom_call.1']
    #allocation5 [shape = 'u8[512]{0}', space=vmem, size = 0x400, scoped, tag = 'input window, operand 2, single buffered']
    #allocation6 [shape = 's32[1]{0}', space=sflag, size = 0x4, scoped, tag = 'scoped memory for tpu_custom_call.1']
    #allocation7 [shape = 'u8[2048]{0}', space=vmem, size = 0x800, scoped, tag = 'input window, operand 3, single buffered']
    #allocation8 [shape = 'u8[512]{0}', space=vmem, size = 0x400, scoped, tag = 'input window, operand 4, single buffered']
    #allocation9 [shape = 's32[1]{0}', space=sflag, size = 0x4, scoped, tag = 'scoped memory for tpu_custom_call.1']
    #allocation10 [shape = 'u8[12288]{0}', space=vmem, size = 0x3000, scoped, tag = 'input window, operand 5, single buffered']
    #allocation11 [shape = 'u8[512]{0}', space=vmem, size = 0x400, scoped, tag = 'input window, operand 6, single buffered']
    #allocation12 [shape = 's32[1]{0}', space=sflag, size = 0x4, scoped, tag = 'scoped memory for tpu_custom_call.1']
    #allocation13 [shape = 'u8[4096]{0}', space=vmem, size = 0x1000, scoped, tag = 'input window, operand 7, single buffered']
    #allocation14 [shape = 'u8[512]{0}', space=vmem, size = 0x400, scoped, tag = 'input window, operand 8, single buffered']
    #allocation15 [shape = 's32[1]{0}', space=sflag, size = 0x4, scoped, tag = 'scoped memory for tpu_custom_call.1']
    #allocation16 [shape = 'u8[8192]{0}', space=vmem, size = 0x2000, scoped, tag = 'input window, operand 11, single buffered']
    #allocation17 [shape = 'u8[24576]{0}', space=vmem, size = 0x6000, scoped, tag = 'input window, operand 13, single buffered']
    #allocation18 [shape = 's32[1]{0}', space=sflag, size = 0x4, scoped, tag = 'scoped memory for tpu_custom_call.1']
    #allocation19 [shape = 'u8[24576]{0}', space=vmem, size = 0x6000, scoped, tag = 'input window, operand 15, single buffered']
    #allocation20 [shape = 'u8[16384]{0}', space=vmem, size = 0x4000, scoped, tag = 'output window, operand 0']
    %22 = vsyncpa [#allocation3], 0
    %23 = vsyncpa [#allocation6], 0
    %24 = vsyncpa [#allocation9], 0
    %25 = vsyncpa [#allocation12], 0
    %26 = vsyncpa [#allocation15], 0
    %27 = vsyncpa [#allocation18], 0
    %28 = vsyncpa [#allocation4], 0
    %s29 = scalar_lea.sflag [#allocation4], 1
    %30 = vsyncpa %s29, 0
    loop: start=0, step=1, limit=4
    $region2: #{tpu_custom_call.1} parent=1 // loop_pre_header
      _
    $region3: #{tpu_custom_call.1} parent=1 // loop_header
      %s32 = sphi 0, %s36
      %p33 = scmp.ge.s32.totalorder %s32, 4
      %s42 = sphi 0, %s44
      %s45 = sphi 0, %s42
      %s46 = sphi 0, %s45
      %s62 = sphi 0, %s46
      %s66 = sphi 0, %s66
      %s68 = sphi 0, %s66
      %s69 = sphi 0, %s68
      %s83 = sphi 0, %s69
      %s87 = sphi 0, %s87
      %s89 = sphi 0, %s87
      %s90 = sphi 0, %s89
      %s104 = sphi 0, %s90
      %s108 = sphi 0, %s108
      %s110 = sphi 0, %s108
      %s111 = sphi 0, %s110
      %s125 = sphi 0, %s111
      %s129 = sphi 0, %s129
      %s131 = sphi 0, %s129
      %s132 = sphi 0, %s131
      %s146 = sphi 0, %s132
      %s150 = sphi 0, %s150
      %s152 = sphi 0, %s150
      %s153 = sphi 0, %s152
      %s167 = sphi 0, %s153
      %s171 = sphi 0, %s171
      %s173 = sphi 0, %s171
      %s174 = sphi 0, %s173
      %s188 = sphi 0, %s174
      %s192 = sphi 0, %s192
      %s194 = sphi 0, %s192
      %s195 = sphi 0, %s194
      %s209 = sphi 0, %s195
      %s213 = sphi 0, %s213
      %s215 = sphi 0, %s213
      %s216 = sphi 0, %s215
      %s230 = sphi 0, %s216
      %s234 = sphi 0, %s234
      %s236 = sphi 0, %s234
      %s237 = sphi 0, %s236
      %s251 = sphi 0, %s237
      %s255 = sphi 0, %s255
      %s257 = sphi 0, %s255
      %s258 = sphi 0, %s257
      %s272 = sphi 0, %s258
      %s276 = sphi 0, %s276
      %s278 = sphi 0, %s276
      %s279 = sphi 0, %s278
      %s293 = sphi 0, %s279
      %s297 = sphi 0, %s297
      %s299 = sphi 0, %s297
      %s300 = sphi 0, %s299
      %s314 = sphi 0, %s300
      %s318 = sphi 0, %s318
      %s320 = sphi 0, %s318
      %s321 = sphi 0, %s320
      %s335 = sphi 0, %s321
      %s339 = sphi 0, %s339
      %s341 = sphi 0, %s339
      %s342 = sphi 0, %s341
      %s356 = sphi 0, %s342
      %s360 = sphi 0, %s360
      %s362 = sphi 0, %s360
      %s363 = sphi 0, %s362
      %s377 = sphi 0, %s363
      %s381 = sphi 0, %s381
      %s383 = sphi 0, %s381
      %s384 = sphi 0, %s383
      %s398 = sphi 0, %s384
      %s404 = sphi 0, %s406
      %s407 = sphi 0, %s404
      %s408 = sphi 0, %s407
      %s424 = sphi 0, %s408
    $region4: #{tpu_custom_call.1} parent=1 // loop_header_branch
      %35 = sbr.rel (%p33) target = $region8
    $region5: #{tpu_custom_call.1} parent=1 // loop_body
      %s37 = ssub.s32 %s32, 1
      %s38 = ssub.s32 %s32, 2
      %s39 = sadd.s32 %s32, 1
      %s40 = ssub.s32 %s32, %s39
      %p41 = scmp.eq.s32.totalorder %s40, 0
      %s43 = sadd.s32 %s42, 1
      %s44 = scalar_select %p41, %s42, %s43
      %p47 = pneg %p41
      %p48 = scmp.eq.s32.totalorder %s32, 1
      %p49 = por %p47, %p48
      %p50 = scmp.ne.s32.totalorder %s42, %s45
      %p51 = scmp.eq.s32.totalorder %s32, 0
      %p52 = por %p50, %p51
      %p53 = scmp.ne.s32.totalorder %s42, %s45
      %p54 = scmp.eq.s32.totalorder %s37, 1
      %p55 = por %p53, %p54
      %p56 = scmp.ne.s32.totalorder %s45, %s46
      %p57 = scmp.eq.s32.totalorder %s37, 0
      %p58 = por %p56, %p57
      %p59 = scmp.ne.s32.totalorder %s45, %s46
      %p60 = scmp.eq.s32.totalorder %s38, 1
      %p61 = por %p59, %p60
      %p63 = scmp.ne.s32.totalorder %s46, %s62
      %p64 = scmp.eq.s32.totalorder %s38, 0
      %p65 = por %p63, %p64
      %s67 = sadd.s32 %s66, 1
      %p70 = scmp.eq.s32.totalorder %s32, 1
      %p71 = scmp.ne.s32.totalorder %s66, %s68
      %p72 = scmp.eq.s32.totalorder %s32, 0
      %p73 = por %p71, %p72
      %p74 = scmp.ne.s32.totalorder %s66, %s68
      %p75 = scmp.eq.s32.totalorder %s37, 1
      %p76 = por %p74, %p75
      %p77 = scmp.ne.s32.totalorder %s68, %s69
      %p78 = scmp.eq.s32.totalorder %s37, 0
      %p79 = por %p77, %p78
      %p80 = scmp.ne.s32.totalorder %s68, %s69
      %p81 = scmp.eq.s32.totalorder %s38, 1
      %p82 = por %p80, %p81
      %p84 = scmp.ne.s32.totalorder %s69, %s83
      %p85 = scmp.eq.s32.totalorder %s38, 0
      %p86 = por %p84, %p85
      %s88 = sadd.s32 %s87, 1
      %p91 = scmp.eq.s32.totalorder %s32, 1
      %p92 = scmp.ne.s32.totalorder %s87, %s89
      %p93 = scmp.eq.s32.totalorder %s32, 0
      %p94 = por %p92, %p93
      %p95 = scmp.ne.s32.totalorder %s87, %s89
      %p96 = scmp.eq.s32.totalorder %s37, 1
      %p97 = por %p95, %p96
      %p98 = scmp.ne.s32.totalorder %s89, %s90
      %p99 = scmp.eq.s32.totalorder %s37, 0
      %p100 = por %p98, %p99
      %p101 = scmp.ne.s32.totalorder %s89, %s90
      %p102 = scmp.eq.s32.totalorder %s38, 1
      %p103 = por %p101, %p102
      %p105 = scmp.ne.s32.totalorder %s90, %s104
      %p106 = scmp.eq.s32.totalorder %s38, 0
      %p107 = por %p105, %p106
      %s109 = sadd.s32 %s108, 1
      %p112 = scmp.eq.s32.totalorder %s32, 1
      %p113 = scmp.ne.s32.totalorder %s108, %s110
      %p114 = scmp.eq.s32.totalorder %s32, 0
      %p115 = por %p113, %p114
      %p116 = scmp.ne.s32.totalorder %s108, %s110
      %p117 = scmp.eq.s32.totalorder %s37, 1
      %p118 = por %p116, %p117
      %p119 = scmp.ne.s32.totalorder %s110, %s111
      %p120 = scmp.eq.s32.totalorder %s37, 0
      %p121 = por %p119, %p120
      %p122 = scmp.ne.s32.totalorder %s110, %s111
      %p123 = scmp.eq.s32.totalorder %s38, 1
      %p124 = por %p122, %p123
      %p126 = scmp.ne.s32.totalorder %s111, %s125
      %p127 = scmp.eq.s32.totalorder %s38, 0
      %p128 = por %p126, %p127
      %s130 = sadd.s32 %s129, 1
      %p133 = scmp.eq.s32.totalorder %s32, 1
      %p134 = scmp.ne.s32.totalorder %s129, %s131
      %p135 = scmp.eq.s32.totalorder %s32, 0
      %p136 = por %p134, %p135
      %p137 = scmp.ne.s32.totalorder %s129, %s131
      %p138 = scmp.eq.s32.totalorder %s37, 1
      %p139 = por %p137, %p138
      %p140 = scmp.ne.s32.totalorder %s131, %s132
      %p141 = scmp.eq.s32.totalorder %s37, 0
      %p142 = por %p140, %p141
      %p143 = scmp.ne.s32.totalorder %s131, %s132
      %p144 = scmp.eq.s32.totalorder %s38, 1
      %p145 = por %p143, %p144
      %p147 = scmp.ne.s32.totalorder %s132, %s146
      %p148 = scmp.eq.s32.totalorder %s38, 0
      %p149 = por %p147, %p148
      %s151 = sadd.s32 %s150, 1
      %p154 = scmp.eq.s32.totalorder %s32, 1
      %p155 = scmp.ne.s32.totalorder %s150, %s152
      %p156 = scmp.eq.s32.totalorder %s32, 0
      %p157 = por %p155, %p156
      %p158 = scmp.ne.s32.totalorder %s150, %s152
      %p159 = scmp.eq.s32.totalorder %s37, 1
      %p160 = por %p158, %p159
      %p161 = scmp.ne.s32.totalorder %s152, %s153
      %p162 = scmp.eq.s32.totalorder %s37, 0
      %p163 = por %p161, %p162
      %p164 = scmp.ne.s32.totalorder %s152, %s153
      %p165 = scmp.eq.s32.totalorder %s38, 1
      %p166 = por %p164, %p165
      %p168 = scmp.ne.s32.totalorder %s153, %s167
      %p169 = scmp.eq.s32.totalorder %s38, 0
      %p170 = por %p168, %p169
      %s172 = sadd.s32 %s171, 1
      %p175 = scmp.eq.s32.totalorder %s32, 1
      %p176 = scmp.ne.s32.totalorder %s171, %s173
      %p177 = scmp.eq.s32.totalorder %s32, 0
      %p178 = por %p176, %p177
      %p179 = scmp.ne.s32.totalorder %s171, %s173
      %p180 = scmp.eq.s32.totalorder %s37, 1
      %p181 = por %p179, %p180
      %p182 = scmp.ne.s32.totalorder %s173, %s174
      %p183 = scmp.eq.s32.totalorder %s37, 0
      %p184 = por %p182, %p183
      %p185 = scmp.ne.s32.totalorder %s173, %s174
      %p186 = scmp.eq.s32.totalorder %s38, 1
      %p187 = por %p185, %p186
      %p189 = scmp.ne.s32.totalorder %s174, %s188
      %p190 = scmp.eq.s32.totalorder %s38, 0
      %p191 = por %p189, %p190
      %s193 = sadd.s32 %s192, 1
      %p196 = scmp.eq.s32.totalorder %s32, 1
      %p197 = scmp.ne.s32.totalorder %s192, %s194
      %p198 = scmp.eq.s32.totalorder %s32, 0
      %p199 = por %p197, %p198
      %p200 = scmp.ne.s32.totalorder %s192, %s194
      %p201 = scmp.eq.s32.totalorder %s37, 1
      %p202 = por %p200, %p201
      %p203 = scmp.ne.s32.totalorder %s194, %s195
      %p204 = scmp.eq.s32.totalorder %s37, 0
      %p205 = por %p203, %p204
      %p206 = scmp.ne.s32.totalorder %s194, %s195
      %p207 = scmp.eq.s32.totalorder %s38, 1
      %p208 = por %p206, %p207
      %p210 = scmp.ne.s32.totalorder %s195, %s209
      %p211 = scmp.eq.s32.totalorder %s38, 0
      %p212 = por %p210, %p211
      %s214 = sadd.s32 %s213, 1
      %p217 = scmp.eq.s32.totalorder %s32, 1
      %p218 = scmp.ne.s32.totalorder %s213, %s215
      %p219 = scmp.eq.s32.totalorder %s32, 0
      %p220 = por %p218, %p219
      %p221 = scmp.ne.s32.totalorder %s213, %s215
      %p222 = scmp.eq.s32.totalorder %s37, 1
      %p223 = por %p221, %p222
      %p224 = scmp.ne.s32.totalorder %s215, %s216
      %p225 = scmp.eq.s32.totalorder %s37, 0
      %p226 = por %p224, %p225
      %p227 = scmp.ne.s32.totalorder %s215, %s216
      %p228 = scmp.eq.s32.totalorder %s38, 1
      %p229 = por %p227, %p228
      %p231 = scmp.ne.s32.totalorder %s216, %s230
      %p232 = scmp.eq.s32.totalorder %s38, 0
      %p233 = por %p231, %p232
      %s235 = sadd.s32 %s234, 1
      %p238 = scmp.eq.s32.totalorder %s32, 1
      %p239 = scmp.ne.s32.totalorder %s234, %s236
      %p240 = scmp.eq.s32.totalorder %s32, 0
      %p241 = por %p239, %p240
      %p242 = scmp.ne.s32.totalorder %s234, %s236
      %p243 = scmp.eq.s32.totalorder %s37, 1
      %p244 = por %p242, %p243
      %p245 = scmp.ne.s32.totalorder %s236, %s237
      %p246 = scmp.eq.s32.totalorder %s37, 0
      %p247 = por %p245, %p246
      %p248 = scmp.ne.s32.totalorder %s236, %s237
      %p249 = scmp.eq.s32.totalorder %s38, 1
      %p250 = por %p248, %p249
      %p252 = scmp.ne.s32.totalorder %s237, %s251
      %p253 = scmp.eq.s32.totalorder %s38, 0
      %p254 = por %p252, %p253
      %s256 = sadd.s32 %s255, 1
      %p259 = scmp.eq.s32.totalorder %s32, 1
      %p260 = scmp.ne.s32.totalorder %s255, %s257
      %p261 = scmp.eq.s32.totalorder %s32, 0
      %p262 = por %p260, %p261
      %p263 = scmp.ne.s32.totalorder %s255, %s257
      %p264 = scmp.eq.s32.totalorder %s37, 1
      %p265 = por %p263, %p264
      %p266 = scmp.ne.s32.totalorder %s257, %s258
      %p267 = scmp.eq.s32.totalorder %s37, 0
      %p268 = por %p266, %p267
      %p269 = scmp.ne.s32.totalorder %s257, %s258
      %p270 = scmp.eq.s32.totalorder %s38, 1
      %p271 = por %p269, %p270
      %p273 = scmp.ne.s32.totalorder %s258, %s272
      %p274 = scmp.eq.s32.totalorder %s38, 0
      %p275 = por %p273, %p274
      %s277 = sadd.s32 %s276, 1
      %p280 = scmp.eq.s32.totalorder %s32, 1
      %p281 = scmp.ne.s32.totalorder %s276, %s278
      %p282 = scmp.eq.s32.totalorder %s32, 0
      %p283 = por %p281, %p282
      %p284 = scmp.ne.s32.totalorder %s276, %s278
      %p285 = scmp.eq.s32.totalorder %s37, 1
      %p286 = por %p284, %p285
      %p287 = scmp.ne.s32.totalorder %s278, %s279
      %p288 = scmp.eq.s32.totalorder %s37, 0
      %p289 = por %p287, %p288
      %p290 = scmp.ne.s32.totalorder %s278, %s279
      %p291 = scmp.eq.s32.totalorder %s38, 1
      %p292 = por %p290, %p291
      %p294 = scmp.ne.s32.totalorder %s279, %s293
      %p295 = scmp.eq.s32.totalorder %s38, 0
      %p296 = por %p294, %p295
      %s298 = sadd.s32 %s297, 1
      %p301 = scmp.eq.s32.totalorder %s32, 1
      %p302 = scmp.ne.s32.totalorder %s297, %s299
      %p303 = scmp.eq.s32.totalorder %s32, 0
      %p304 = por %p302, %p303
      %p305 = scmp.ne.s32.totalorder %s297, %s299
      %p306 = scmp.eq.s32.totalorder %s37, 1
      %p307 = por %p305, %p306
      %p308 = scmp.ne.s32.totalorder %s299, %s300
      %p309 = scmp.eq.s32.totalorder %s37, 0
      %p310 = por %p308, %p309
      %p311 = scmp.ne.s32.totalorder %s299, %s300
      %p312 = scmp.eq.s32.totalorder %s38, 1
      %p313 = por %p311, %p312
      %p315 = scmp.ne.s32.totalorder %s300, %s314
      %p316 = scmp.eq.s32.totalorder %s38, 0
      %p317 = por %p315, %p316
      %s319 = sadd.s32 %s318, 1
      %p322 = scmp.eq.s32.totalorder %s32, 1
      %p323 = scmp.ne.s32.totalorder %s318, %s320
      %p324 = scmp.eq.s32.totalorder %s32, 0
      %p325 = por %p323, %p324
      %p326 = scmp.ne.s32.totalorder %s318, %s320
      %p327 = scmp.eq.s32.totalorder %s37, 1
      %p328 = por %p326, %p327
      %p329 = scmp.ne.s32.totalorder %s320, %s321
      %p330 = scmp.eq.s32.totalorder %s37, 0
      %p331 = por %p329, %p330
      %p332 = scmp.ne.s32.totalorder %s320, %s321
      %p333 = scmp.eq.s32.totalorder %s38, 1
      %p334 = por %p332, %p333
      %p336 = scmp.ne.s32.totalorder %s321, %s335
      %p337 = scmp.eq.s32.totalorder %s38, 0
      %p338 = por %p336, %p337
      %s340 = sadd.s32 %s339, 1
      %p343 = scmp.eq.s32.totalorder %s32, 1
      %p344 = scmp.ne.s32.totalorder %s339, %s341
      %p345 = scmp.eq.s32.totalorder %s32, 0
      %p346 = por %p344, %p345
      %p347 = scmp.ne.s32.totalorder %s339, %s341
      %p348 = scmp.eq.s32.totalorder %s37, 1
      %p349 = por %p347, %p348
      %p350 = scmp.ne.s32.totalorder %s341, %s342
      %p351 = scmp.eq.s32.totalorder %s37, 0
      %p352 = por %p350, %p351
      %p353 = scmp.ne.s32.totalorder %s341, %s342
      %p354 = scmp.eq.s32.totalorder %s38, 1
      %p355 = por %p353, %p354
      %p357 = scmp.ne.s32.totalorder %s342, %s356
      %p358 = scmp.eq.s32.totalorder %s38, 0
      %p359 = por %p357, %p358
      %s361 = sadd.s32 %s360, 1
      %p364 = scmp.eq.s32.totalorder %s32, 1
      %p365 = scmp.ne.s32.totalorder %s360, %s362
      %p366 = scmp.eq.s32.totalorder %s32, 0
      %p367 = por %p365, %p366
      %p368 = scmp.ne.s32.totalorder %s360, %s362
      %p369 = scmp.eq.s32.totalorder %s37, 1
      %p370 = por %p368, %p369
      %p371 = scmp.ne.s32.totalorder %s362, %s363
      %p372 = scmp.eq.s32.totalorder %s37, 0
      %p373 = por %p371, %p372
      %p374 = scmp.ne.s32.totalorder %s362, %s363
      %p375 = scmp.eq.s32.totalorder %s38, 1
      %p376 = por %p374, %p375
      %p378 = scmp.ne.s32.totalorder %s363, %s377
      %p379 = scmp.eq.s32.totalorder %s38, 0
      %p380 = por %p378, %p379
      %s382 = sadd.s32 %s381, 1
      %p385 = scmp.eq.s32.totalorder %s32, 1
      %p386 = scmp.ne.s32.totalorder %s381, %s383
      %p387 = scmp.eq.s32.totalorder %s32, 0
      %p388 = por %p386, %p387
      %p389 = scmp.ne.s32.totalorder %s381, %s383
      %p390 = scmp.eq.s32.totalorder %s37, 1
      %p391 = por %p389, %p390
      %p392 = scmp.ne.s32.totalorder %s383, %s384
      %p393 = scmp.eq.s32.totalorder %s37, 0
      %p394 = por %p392, %p393
      %p395 = scmp.ne.s32.totalorder %s383, %s384
      %p396 = scmp.eq.s32.totalorder %s38, 1
      %p397 = por %p395, %p396
      %p399 = scmp.ne.s32.totalorder %s384, %s398
      %p400 = scmp.eq.s32.totalorder %s38, 0
      %p401 = por %p399, %p400
      %s402 = ssub.s32 %s32, %s39
      %p403 = scmp.eq.s32.totalorder %s402, 0
      %s405 = sadd.s32 %s404, 1
      %s406 = scalar_select %p403, %s404, %s405
      %p409 = pneg %p403
      %p410 = scmp.eq.s32.totalorder %s32, 1
      %p411 = por %p409, %p410
      %p412 = scmp.ne.s32.totalorder %s404, %s407
      %p413 = scmp.eq.s32.totalorder %s32, 0
      %p414 = por %p412, %p413
      %p415 = scmp.ne.s32.totalorder %s404, %s407
      %p416 = scmp.eq.s32.totalorder %s37, 1
      %p417 = por %p415, %p416
      %p418 = scmp.ne.s32.totalorder %s407, %s408
      %p419 = scmp.eq.s32.totalorder %s37, 0
      %p420 = por %p418, %p419
      %p421 = scmp.ne.s32.totalorder %s407, %s408
      %p422 = scmp.eq.s32.totalorder %s38, 1
      %p423 = por %p421, %p422
      %p425 = scmp.ne.s32.totalorder %s408, %s424
      %p426 = scmp.eq.s32.totalorder %s38, 0
      %p427 = por %p425, %p426
      %p428 = scmp.le.s32.totalorder 1, %s32
      %p429 = scmp.lt.s32.totalorder %s32, 3
      %p430 = pnand %p428, %p429
      %p431 = pneg %p430
      // Predicated region
      $region9: #{tpu_custom_call.1} parent=5 // pred_check
        _
      $region10: #{tpu_custom_call.1} parent=5 // pred_check_branch
        %433 = sbr.rel (%p430) target = $region12
      $region11: #{tpu_custom_call.1} parent=5 // pred_region
        %s434 = ssub.s32 %s32, 1
        // Predicated region
        $region13: #{tpu_custom_call.1} parent=11 // pred_check
          %p435 = pneg %p79
        $region14: #{tpu_custom_call.1} parent=11 // pred_check_branch
          %437 = sbr.rel (%p435) target = $region16
        $region15: #{tpu_custom_call.1} parent=11 // pred_region
          %439 = vsyncadd [#allocation3], 0
          %s440 = sshll.u32 %s1, 4
          %s441 = int_to_ptr.hbm [resolvable:$true] %s440
          %s442 = sshll.u32 [#allocation2], 4
          %s443 = int_to_ptr.vmem [resolvable:$true] %s442
          %448 = dma.hbm_to_vmem [thread:$0]  %s441, 192, %s443, [#allocation3], 64, 64, 4
        $region16: #{tpu_custom_call.1} parent=11 // pred_fallthru
          _
        // Predicated region
        $region17: #{tpu_custom_call.1} parent=11 // pred_check
          %p449 = pneg %p100
        $region18: #{tpu_custom_call.1} parent=11 // pred_check_branch
          %451 = sbr.rel (%p449) target = $region20
        $region19: #{tpu_custom_call.1} parent=11 // pred_region
          %453 = vsyncadd [#allocation6], 0
          %s455 = sshll.u32 %s2, 4
          %s456 = int_to_ptr.hbm [resolvable:$true] %s455
          %s457 = sshll.u32 [#allocation5], 4
          %s458 = int_to_ptr.vmem [resolvable:$true] %s457
          %460 = dma.hbm_to_vmem [thread:$0]  %s456, 16, %s458, [#allocation6]
        $region20: #{tpu_custom_call.1} parent=11 // pred_fallthru
          _
        // Predicated region
        $region21: #{tpu_custom_call.1} parent=11 // pred_check
          %p461 = pneg %p121
        $region22: #{tpu_custom_call.1} parent=11 // pred_check_branch
          %463 = sbr.rel (%p461) target = $region24
        $region23: #{tpu_custom_call.1} parent=11 // pred_region
          %465 = vsyncadd [#allocation6], 0
          %s467 = sshll.u32 %s3, 4
          %s468 = int_to_ptr.hbm [resolvable:$true] %s467
          %s469 = sshll.u32 [#allocation7], 4
          %s470 = int_to_ptr.vmem [resolvable:$true] %s469
          %472 = dma.hbm_to_vmem [thread:$0]  %s468, 64, %s470, [#allocation6]
        $region24: #{tpu_custom_call.1} parent=11 // pred_fallthru
          _
        // Predicated region
        $region25: #{tpu_custom_call.1} parent=11 // pred_check
          %p473 = pneg %p142
        $region26: #{tpu_custom_call.1} parent=11 // pred_check_branch
          %475 = sbr.rel (%p473) target = $region28
        $region27: #{tpu_custom_call.1} parent=11 // pred_region
          %477 = vsyncadd [#allocation9], 0
          %s479 = sshll.u32 %s4, 4
          %s480 = int_to_ptr.hbm [resolvable:$true] %s479
          %s481 = sshll.u32 [#allocation8], 4
          %s482 = int_to_ptr.vmem [resolvable:$true] %s481
          %484 = dma.hbm_to_vmem [thread:$0]  %s480, 16, %s482, [#allocation9]
        $region28: #{tpu_custom_call.1} parent=11 // pred_fallthru
          _
        // Predicated region
        $region29: #{tpu_custom_call.1} parent=11 // pred_check
          %p485 = pneg %p163
        $region30: #{tpu_custom_call.1} parent=11 // pred_check_branch
          %487 = sbr.rel (%p485) target = $region32
        $region31: #{tpu_custom_call.1} parent=11 // pred_region
          %489 = vsyncadd [#allocation9], 0
          %s490 = sshll.u32 %s5, 4
          %s491 = int_to_ptr.hbm [resolvable:$true] %s490
          %s492 = sshll.u32 [#allocation10], 4
          %s493 = int_to_ptr.vmem [resolvable:$true] %s492
          %498 = dma.hbm_to_vmem [thread:$0]  %s491, 384, %s493, [#allocation9], 128, 128, 8
        $region32: #{tpu_custom_call.1} parent=11 // pred_fallthru
          _
        // Predicated region
        $region33: #{tpu_custom_call.1} parent=11 // pred_check
          %p499 = pneg %p184
        $region34: #{tpu_custom_call.1} parent=11 // pred_check_branch
          %501 = sbr.rel (%p499) target = $region36
        $region35: #{tpu_custom_call.1} parent=11 // pred_region
          %503 = vsyncadd [#allocation12], 0
          %s505 = sshll.u32 %s6, 4
          %s506 = int_to_ptr.hbm [resolvable:$true] %s505
          %s507 = sshll.u32 [#allocation11], 4
          %s508 = int_to_ptr.vmem [resolvable:$true] %s507
          %510 = dma.hbm_to_vmem [thread:$0]  %s506, 16, %s508, [#allocation12]
        $region36: #{tpu_custom_call.1} parent=11 // pred_fallthru
          _
        // Predicated region
        $region37: #{tpu_custom_call.1} parent=11 // pred_check
          %p511 = pneg %p205
        $region38: #{tpu_custom_call.1} parent=11 // pred_check_branch
          %513 = sbr.rel (%p511) target = $region40
        $region39: #{tpu_custom_call.1} parent=11 // pred_region
          %515 = vsyncadd [#allocation12], 0
          %s517 = sshll.u32 %s7, 4
          %s518 = int_to_ptr.hbm [resolvable:$true] %s517
          %s519 = sshll.u32 [#allocation13], 4
          %s520 = int_to_ptr.vmem [resolvable:$true] %s519
          %522 = dma.hbm_to_vmem [thread:$0]  %s518, 128, %s520, [#allocation12]
        $region40: #{tpu_custom_call.1} parent=11 // pred_fallthru
          _
        // Predicated region
        $region41: #{tpu_custom_call.1} parent=11 // pred_check
          %p523 = pneg %p226
        $region42: #{tpu_custom_call.1} parent=11 // pred_check_branch
          %525 = sbr.rel (%p523) target = $region44
        $region43: #{tpu_custom_call.1} parent=11 // pred_region
          %527 = vsyncadd [#allocation15], 0
          %s529 = sshll.u32 %s8, 4
          %s530 = int_to_ptr.hbm [resolvable:$true] %s529
          %s531 = sshll.u32 [#allocation14], 4
          %s532 = int_to_ptr.vmem [resolvable:$true] %s531
          %534 = dma.hbm_to_vmem [thread:$0]  %s530, 16, %s532, [#allocation15]
        $region44: #{tpu_custom_call.1} parent=11 // pred_fallthru
          _
        // Predicated region
        $region45: #{tpu_custom_call.1} parent=11 // pred_check
          %p535 = pneg %p247
        $region46: #{tpu_custom_call.1} parent=11 // pred_check_branch
          %537 = sbr.rel (%p535) target = $region48
        $region47: #{tpu_custom_call.1} parent=11 // pred_region
          _
        $region48: #{tpu_custom_call.1} parent=11 // pred_fallthru
          _
        // Predicated region
        $region49: #{tpu_custom_call.1} parent=11 // pred_check
          %p538 = pneg %p268
        $region50: #{tpu_custom_call.1} parent=11 // pred_check_branch
          %540 = sbr.rel (%p538) target = $region52
        $region51: #{tpu_custom_call.1} parent=11 // pred_region
          _
        $region52: #{tpu_custom_call.1} parent=11 // pred_fallthru
          _
        // Predicated region
        $region53: #{tpu_custom_call.1} parent=11 // pred_check
          %p541 = pneg %p289
        $region54: #{tpu_custom_call.1} parent=11 // pred_check_branch
          %543 = sbr.rel (%p541) target = $region56
        $region55: #{tpu_custom_call.1} parent=11 // pred_region
          %545 = vsyncadd [#allocation15], 0
          %s546 = sshll.u32 %s11, 4
          %s547 = int_to_ptr.hbm [resolvable:$true] %s546
          %s548 = sshll.u32 [#allocation16], 4
          %s549 = int_to_ptr.vmem [resolvable:$true] %s548
          %554 = dma.hbm_to_vmem [thread:$0]  %s547, 256, %s549, [#allocation15], 128, 128, 8
        $region56: #{tpu_custom_call.1} parent=11 // pred_fallthru
          _
        // Predicated region
        $region57: #{tpu_custom_call.1} parent=11 // pred_check
          %p555 = pneg %p310
        $region58: #{tpu_custom_call.1} parent=11 // pred_check_branch
          %557 = sbr.rel (%p555) target = $region60
        $region59: #{tpu_custom_call.1} parent=11 // pred_region
          _
        $region60: #{tpu_custom_call.1} parent=11 // pred_fallthru
          _
        // Predicated region
        $region61: #{tpu_custom_call.1} parent=11 // pred_check
          %p558 = pneg %p331
        $region62: #{tpu_custom_call.1} parent=11 // pred_check_branch
          %560 = sbr.rel (%p558) target = $region64
        $region63: #{tpu_custom_call.1} parent=11 // pred_region
          %562 = vsyncadd [#allocation18], 0
          %s563 = sshll.u32 %s13, 4
          %s564 = int_to_ptr.hbm [resolvable:$true] %s563
          %s565 = sshll.u32 [#allocation17], 4
          %s566 = int_to_ptr.vmem [resolvable:$true] %s565
          %571 = dma.hbm_to_vmem [thread:$0]  %s564, 768, %s566, [#allocation18], 128, 128, 8
        $region64: #{tpu_custom_call.1} parent=11 // pred_fallthru
          _
        // Predicated region
        $region65: #{tpu_custom_call.1} parent=11 // pred_check
          %p572 = pneg %p352
        $region66: #{tpu_custom_call.1} parent=11 // pred_check_branch
          %574 = sbr.rel (%p572) target = $region68
        $region67: #{tpu_custom_call.1} parent=11 // pred_region
          _
        $region68: #{tpu_custom_call.1} parent=11 // pred_fallthru
          _
        // Predicated region
        $region69: #{tpu_custom_call.1} parent=11 // pred_check
          %p575 = pneg %p373
        $region70: #{tpu_custom_call.1} parent=11 // pred_check_branch
          %577 = sbr.rel (%p575) target = $region72
        $region71: #{tpu_custom_call.1} parent=11 // pred_region
          %579 = vsyncadd [#allocation18], 0
          %s580 = sshll.u32 %s15, 4
          %s581 = int_to_ptr.hbm [resolvable:$true] %s580
          %s582 = sshll.u32 [#allocation19], 4
          %s583 = int_to_ptr.vmem [resolvable:$true] %s582
          %588 = dma.hbm_to_vmem [thread:$0]  %s581, 768, %s583, [#allocation18], 128, 128, 8
        $region72: #{tpu_custom_call.1} parent=11 // pred_fallthru
          _
        // Predicated region
        $region73: #{tpu_custom_call.1} parent=11 // pred_check
          %p589 = pneg %p394
        $region74: #{tpu_custom_call.1} parent=11 // pred_check_branch
          %591 = sbr.rel (%p589) target = $region76
        $region75: #{tpu_custom_call.1} parent=11 // pred_region
          _
        $region76: #{tpu_custom_call.1} parent=11 // pred_fallthru
          _
      $region12: #{tpu_custom_call.1} parent=5 // pred_fallthru
        _
      %p592 = scmp.lt.s32.totalorder %s32, 2
      // Predicated region
      $region77: #{tpu_custom_call.1} parent=5 // pred_check
        %p593 = pneg %p592
      $region78: #{tpu_custom_call.1} parent=5 // pred_check_branch
        %595 = sbr.rel (%p593) target = $region80
      $region79: #{tpu_custom_call.1} parent=5 // pred_region
        // Predicated region
        $region81: #{tpu_custom_call.1} parent=79 // pred_check
          %p596 = pneg %p52
        $region82: #{tpu_custom_call.1} parent=79 // pred_check_branch
          %598 = sbr.rel (%p596) target = $region84
        $region83: #{tpu_custom_call.1} parent=79 // pred_region
          %p599 = scmp.lt.s32.totalorder %s32, 1
          %s600 = scalar_select %p599, %s32, 1
          %s601 = smul.addr %s600, 2
          %s602 = smul.addr %s601, 8
          %s603 = scalar_lea.vmem %s0, %s602
        $region84: #{tpu_custom_call.1} parent=79 // pred_fallthru
          _
      $region80: #{tpu_custom_call.1} parent=5 // pred_fallthru
        _
      %p604 = scmp.le.s32.totalorder 1, %s32
      %p605 = scmp.lt.s32.totalorder %s32, 3
      %p606 = pnand %p604, %p605
      %p607 = pneg %p606
      // Predicated region
      $region85: #{tpu_custom_call.1} parent=5 // pred_check
        _
      $region86: #{tpu_custom_call.1} parent=5 // pred_check_branch
        %609 = sbr.rel (%p606) target = $region88
      $region87: #{tpu_custom_call.1} parent=5 // pred_region
        %s610 = ssub.s32 %s32, 1
        // Predicated region
        $region89: #{tpu_custom_call.1} parent=87 // pred_check
          %p611 = pneg %p79
        $region90: #{tpu_custom_call.1} parent=87 // pred_check_branch
          %613 = sbr.rel (%p611) target = $region92
        $region91: #{tpu_custom_call.1} parent=87 // pred_region
          %615 = dma.done [#allocation3], 192
        $region92: #{tpu_custom_call.1} parent=87 // pred_fallthru
          _
        // Predicated region
        $region93: #{tpu_custom_call.1} parent=87 // pred_check
          %p616 = pneg %p100
        $region94: #{tpu_custom_call.1} parent=87 // pred_check_branch
          %618 = sbr.rel (%p616) target = $region96
        $region95: #{tpu_custom_call.1} parent=87 // pred_region
          %620 = dma.done [#allocation6], 16
        $region96: #{tpu_custom_call.1} parent=87 // pred_fallthru
          _
        // Predicated region
        $region97: #{tpu_custom_call.1} parent=87 // pred_check
          %p621 = pneg %p121
        $region98: #{tpu_custom_call.1} parent=87 // pred_check_branch
          %623 = sbr.rel (%p621) target = $region100
        $region99: #{tpu_custom_call.1} parent=87 // pred_region
          %625 = dma.done [#allocation6], 64
        $region100: #{tpu_custom_call.1} parent=87 // pred_fallthru
          _
        // Predicated region
        $region101: #{tpu_custom_call.1} parent=87 // pred_check
          %p626 = pneg %p142
        $region102: #{tpu_custom_call.1} parent=87 // pred_check_branch
          %628 = sbr.rel (%p626) target = $region104
        $region103: #{tpu_custom_call.1} parent=87 // pred_region
          %630 = dma.done [#allocation9], 16
        $region104: #{tpu_custom_call.1} parent=87 // pred_fallthru
          _
        // Predicated region
        $region105: #{tpu_custom_call.1} parent=87 // pred_check
          %p631 = pneg %p163
        $region106: #{tpu_custom_call.1} parent=87 // pred_check_branch
          %633 = sbr.rel (%p631) target = $region108
        $region107: #{tpu_custom_call.1} parent=87 // pred_region
          %635 = dma.done [#allocation9], 384
        $region108: #{tpu_custom_call.1} parent=87 // pred_fallthru
          _
        // Predicated region
        $region109: #{tpu_custom_call.1} parent=87 // pred_check
          %p636 = pneg %p184
        $region110: #{tpu_custom_call.1} parent=87 // pred_check_branch
          %638 = sbr.rel (%p636) target = $region112
        $region111: #{tpu_custom_call.1} parent=87 // pred_region
          %640 = dma.done [#allocation12], 16
        $region112: #{tpu_custom_call.1} parent=87 // pred_fallthru
          _
        // Predicated region
        $region113: #{tpu_custom_call.1} parent=87 // pred_check
          %p641 = pneg %p205
        $region114: #{tpu_custom_call.1} parent=87 // pred_check_branch
          %643 = sbr.rel (%p641) target = $region116
        $region115: #{tpu_custom_call.1} parent=87 // pred_region
          %645 = dma.done [#allocation12], 128
        $region116: #{tpu_custom_call.1} parent=87 // pred_fallthru
          _
        // Predicated region
        $region117: #{tpu_custom_call.1} parent=87 // pred_check
          %p646 = pneg %p226
        $region118: #{tpu_custom_call.1} parent=87 // pred_check_branch
          %648 = sbr.rel (%p646) target = $region120
        $region119: #{tpu_custom_call.1} parent=87 // pred_region
          %650 = dma.done [#allocation15], 16
        $region120: #{tpu_custom_call.1} parent=87 // pred_fallthru
          _
        // Predicated region
        $region121: #{tpu_custom_call.1} parent=87 // pred_check
          %p651 = pneg %p289
        $region122: #{tpu_custom_call.1} parent=87 // pred_check_branch
          %653 = sbr.rel (%p651) target = $region124
        $region123: #{tpu_custom_call.1} parent=87 // pred_region
          %655 = dma.done [#allocation15], 256
        $region124: #{tpu_custom_call.1} parent=87 // pred_fallthru
          _
        // Predicated region
        $region125: #{tpu_custom_call.1} parent=87 // pred_check
          %p656 = pneg %p331
        $region126: #{tpu_custom_call.1} parent=87 // pred_check_branch
          %658 = sbr.rel (%p656) target = $region128
        $region127: #{tpu_custom_call.1} parent=87 // pred_region
          %660 = dma.done [#allocation18], 768
        $region128: #{tpu_custom_call.1} parent=87 // pred_fallthru
          _
        // Predicated region
        $region129: #{tpu_custom_call.1} parent=87 // pred_check
          %p661 = pneg %p373
        $region130: #{tpu_custom_call.1} parent=87 // pred_check_branch
          %663 = sbr.rel (%p661) target = $region132
        $region131: #{tpu_custom_call.1} parent=87 // pred_region
          %665 = dma.done [#allocation18], 768
        $region132: #{tpu_custom_call.1} parent=87 // pred_fallthru
          _
        %p666 = scmp.lt.s32.totalorder %s37, 1
        %s667 = scalar_select %p666, %s37, 1
        %s668 = smul.addr %s667, 2
        %s669 = smul.addr %s668, 8
        %s670 = scalar_lea.vmem %s0, %s669
        %p671 = pneg %p58
        %p672 = pneg %p55
        %p673 = pneg %p79
        %p674 = pneg %p76
        %p675 = pneg %p100
        %p676 = pneg %p97
        %p677 = pneg %p121
        %p678 = pneg %p118
        %p679 = pneg %p142
        %p680 = pneg %p139
        %p681 = pneg %p163
        %p682 = pneg %p160
        %p683 = pneg %p184
        %p684 = pneg %p181
        %p685 = pneg %p205
        %p686 = pneg %p202
        %p687 = pneg %p226
        %p688 = pneg %p223
        %p689 = pneg %p247
        %p690 = pneg %p244
        %p691 = pneg %p268
        %p692 = pneg %p265
        %p693 = pneg %p289
        %p694 = pneg %p286
        %p695 = pneg %p310
        %p696 = pneg %p307
        %p697 = pneg %p331
        %p698 = pneg %p328
        %p699 = pneg %p352
        %p700 = pneg %p349
        %p701 = pneg %p373
        %p702 = pneg %p370
        %p703 = pneg %p394
        %p704 = pneg %p391
        %p705 = pneg %p420
        %p706 = pneg %p417
        %s707 = sand.u32 %s407, 1
        %s708 = scalar_lea.sflag [#allocation4], %s707
        %s709 = sand.u32 %s407, 1
        %s710 = smul.addr %s709, 16
        %s711 = scalar_lea.vmem [#allocation20], %s710
        %p712 = scmp.lt.s32.totalorder %s37, 1
        %s713 = scalar_select %p712, %s37, 1
        %s714 = smul.addr %s713, 2
        %s715 = smul.addr %s714, 8
        %s716 = scalar_lea.vmem %s0, %s715
        %v717 = vld [vmem:[%s716] sm:$0xff]
        %v718 = vld [vmem:[%s716 + $0x8] sm:$0xff]
        %v719 = vld [vmem:[#allocation2] sm:$0xf]
        %v720 = vld [vmem:[#allocation2 + $0x4] sm:$0xf]
        %v721 = vld [vmem:[#allocation2 + $0x8] sm:$0xf]
        %v722 = vld [vmem:[#allocation5] sm:$0x1]
        %v724 = vperm.slane %v722, 0
        %vm726 = vcmask 31744
        %v728 = vsel %vm726, %v717, 0
        %v731 = vsel %vm726, %v718, 0
        %vm733 = vcmask 1043456
        %v735 = vsel %vm733, %v720, 0
        %737 = vmatpush.msra.mxu0 0.0
        %738 = vmatpush.msra.mxu0 0.0
        %739 = vmatpush.msra.mxu0 0.0
        %740 = vmatpush.msra.mxu0 0.0
        %741 = vmatpush.msra.mxu0 0.0
        %742 = vmatpush.msra.mxu0 0.0
        %743 = vmatpush.msra.mxu0 0.0
        %744 = vmatpush.msra.mxu0 0.0
        %745 = vmatpush.msra.mxu0 0.0
        %746 = vmatpush.msra.mxu0 0.0
        %747 = vmatpush.msra.mxu0 0.0
        %748 = vmatpush.msra.mxu0 0.0
        %749 = vmatpush.msra.mxu0 0.0
        %750 = vmatpush.msra.mxu0 0.0
        %751 = vmatpush.msra.mxu0 0.0
        %752 = vmatpush.msra.mxu0 %v735
        %753 = vmatmul.f32.gmra.mxu0 %v728
        %v754 = vpop.f32.mrf.mxu0
        %v755 = vadd.f32 %v724, %v754
        %756 = vmatmul.f32.gmra.mxu0 %v731
        %v757 = vpop.f32.mrf.mxu0
        %v758 = vadd.f32 %v724, %v757
        %759 = vdwg.mxu0
        %vm760 = vcmask 1040384
        %v761 = vrot.slane %v717, 7
        %v762 = vrot.slane %v718, 7
        %v763 = vsel %vm760, %v761, %v762
        %v765 = vsel %vm760, 0.0, %v761
        %v767 = vsel %vm726, %v765, 0
        %v769 = vsel %vm726, %v763, 0
        %v772 = vsel %vm733, %v719, 0
        %774 = vmatpush.msra.mxu0 0.0
        %775 = vmatpush.msra.mxu0 0.0
        %776 = vmatpush.msra.mxu0 0.0
        %777 = vmatpush.msra.mxu0 0.0
        %778 = vmatpush.msra.mxu0 0.0
        %779 = vmatpush.msra.mxu0 0.0
        %780 = vmatpush.msra.mxu0 0.0
        %781 = vmatpush.msra.mxu0 0.0
        %782 = vmatpush.msra.mxu0 0.0
        %783 = vmatpush.msra.mxu0 0.0
        %784 = vmatpush.msra.mxu0 0.0
        %785 = vmatpush.msra.mxu0 0.0
        %786 = vmatpush.msra.mxu0 0.0
        %787 = vmatpush.msra.mxu0 0.0
        %788 = vmatpush.msra.mxu0 0.0
        %789 = vmatpush.msra.mxu0 %v772
        %790 = vmatmul.f32.gmra.mxu0 %v767
        %v791 = vpop.f32.mrf.mxu0
        %v792 = vadd.f32 0.0, %v791
        %793 = vmatmul.f32.gmra.mxu0 %v769
        %v794 = vpop.f32.mrf.mxu0
        %v795 = vadd.f32 0.0, %v794
        %796 = vdwg.mxu0
        %v797 = vadd.f32 %v755, %v792
        %v798 = vadd.f32 %v758, %v795
        %vm799 = vcmask 1046528
        %v800 = vrot.slane %v717, 1
        %v801 = vrot.slane %v718, 1
        %v802 = vsel %vm799, %v800, %v801
        %v804 = vsel %vm799, %v801, 0.0
        %v805 = vsel %vm726, %v802, 0
        %v808 = vsel %vm726, %v804, 0
        %v811 = vsel %vm733, %v721, 0
        %813 = vmatpush.msra.mxu0 0.0
        %814 = vmatpush.msra.mxu0 0.0
        %815 = vmatpush.msra.mxu0 0.0
        %816 = vmatpush.msra.mxu0 0.0
        %817 = vmatpush.msra.mxu0 0.0
        %818 = vmatpush.msra.mxu0 0.0
        %819 = vmatpush.msra.mxu0 0.0
        %820 = vmatpush.msra.mxu0 0.0
        %821 = vmatpush.msra.mxu0 0.0
        %822 = vmatpush.msra.mxu0 0.0
        %823 = vmatpush.msra.mxu0 0.0
        %824 = vmatpush.msra.mxu0 0.0
        %825 = vmatpush.msra.mxu0 0.0
        %826 = vmatpush.msra.mxu0 0.0
        %827 = vmatpush.msra.mxu0 0.0
        %828 = vmatpush.msra.mxu0 %v811
        %829 = vmatmul.f32.gmra.mxu0 %v805
        %v830 = vpop.f32.mrf.mxu0
        %v831 = vadd.f32 0.0, %v830
        %832 = vmatmul.f32.gmra.mxu0 %v808
        %v833 = vpop.f32.mrf.mxu0
        %v834 = vadd.f32 0.0, %v833
        %835 = vdwg.mxu0
        %v836 = vadd.f32 %v797, %v831
        %v837 = vadd.f32 %v798, %v834
        %v838 = vld [vmem:[#allocation7] sm:$0xf]
        %v839 = vld [vmem:[#allocation8] sm:$0x1]
        %v841 = vperm.slane %v839, 0
        %v844 = vsel %vm726, %v836, 0
        %v847 = vsel %vm726, %v837, 0
        %v850 = vsel %vm733, %v838, 0
        %852 = vmatpush.msra.mxu0 0.0
        %853 = vmatpush.msra.mxu0 0.0
        %854 = vmatpush.msra.mxu0 0.0
        %855 = vmatpush.msra.mxu0 0.0
        %856 = vmatpush.msra.mxu0 0.0
        %857 = vmatpush.msra.mxu0 0.0
        %858 = vmatpush.msra.mxu0 0.0
        %859 = vmatpush.msra.mxu0 0.0
        %860 = vmatpush.msra.mxu0 0.0
        %861 = vmatpush.msra.mxu0 0.0
        %862 = vmatpush.msra.mxu0 0.0
        %863 = vmatpush.msra.mxu0 0.0
        %864 = vmatpush.msra.mxu0 0.0
        %865 = vmatpush.msra.mxu0 0.0
        %866 = vmatpush.msra.mxu0 0.0
        %867 = vmatpush.msra.mxu0 %v850
        %868 = vmatmul.f32.gmra.mxu0 %v844
        %v869 = vpop.f32.mrf.mxu0
        %v870 = vadd.f32 %v841, %v869
        %871 = vmatmul.f32.gmra.mxu0 %v847
        %v872 = vpop.f32.mrf.mxu0
        %v873 = vadd.f32 %v841, %v872
        %874 = vdwg.mxu0
        %v875 = vmul.f32 %v870, 0.5
        %v876 = vmul.f32 %v873, 0.5
        %v877 = vmul.f32 %v870, 0.044715
        %v878 = vmul.f32 %v873, 0.044715
        %v879 = vmul.f32 %v877, %v870
        %v880 = vmul.f32 %v878, %v873
        %v881 = vmul.f32 %v879, %v870
        %v882 = vmul.f32 %v880, %v873
        %v883 = vadd.f32 %v870, %v881
        %v884 = vadd.f32 %v873, %v882
        %v885 = vmul.f32 %v883, 0.7978846
        %v886 = vmul.f32 %v884, 0.7978846
        %v887 = vtanh.pop %v885
        %v888 = vtanh.pop %v886
        %v889 = vadd.f32 %v887, 1.0
        %v890 = vadd.f32 %v888, 1.0
        %v891 = vmul.f32 %v875, %v889
        %v892 = vmul.f32 %v876, %v890
        %v893 = vld [vmem:[#allocation10] sm:$0xff]
        %v894 = vld [vmem:[#allocation10 + $0x8] sm:$0xff]
        %v895 = vld [vmem:[#allocation10 + $0x10] sm:$0xff]
        %v896 = vld [vmem:[#allocation11] sm:$0x1]
        %v898 = vperm.slane %v896, 0
        %vm900 = vcmask 64512
        %v902 = vsel %vm900, %v891, 0
        %v905 = vsel %vm900, %v892, 0
        %907 = vmatpush.msra.mxu0 0.0
        %908 = vmatpush.msra.mxu0 0.0
        %909 = vmatpush.msra.mxu0 0.0
        %910 = vmatpush.msra.mxu0 0.0
        %911 = vmatpush.msra.mxu0 0.0
        %912 = vmatpush.msra.mxu0 0.0
        %913 = vmatpush.msra.mxu0 0.0
        %914 = vmatpush.msra.mxu0 0.0
        %915 = vmatpush.msra.mxu0 0.0
        %916 = vmatpush.msra.mxu0 0.0
        %917 = vmatpush.msra.mxu0 0.0
        %918 = vmatpush.msra.mxu0 0.0
        %919 = vmatpush.msra.mxu0 0.0
        %920 = vmatpush.msra.mxu0 0.0
        %921 = vmatpush.msra.mxu0 0.0
        %922 = vmatpush.msra.mxu0 %v894
        %923 = vmatmul.f32.gmra.mxu0 %v902
        %v924 = vpop.f32.mrf.mxu0
        %v925 = vadd.f32 %v898, %v924
        %926 = vmatmul.f32.gmra.mxu0 %v905
        %v927 = vpop.f32.mrf.mxu0
        %v928 = vadd.f32 %v898, %v927
        %929 = vdwg.mxu0
        %v930 = vrot.slane %v891, 7
        %v931 = vrot.slane %v892, 7
        %v932 = vsel %vm760, %v930, %v931
        %v934 = vsel %vm760, 0.0, %v930
        %v936 = vsel %vm900, %v934, 0
        %v938 = vsel %vm900, %v932, 0
        %940 = vmatpush.msra.mxu0 0.0
        %941 = vmatpush.msra.mxu0 0.0
        %942 = vmatpush.msra.mxu0 0.0
        %943 = vmatpush.msra.mxu0 0.0
        %944 = vmatpush.msra.mxu0 0.0
        %945 = vmatpush.msra.mxu0 0.0
        %946 = vmatpush.msra.mxu0 0.0
        %947 = vmatpush.msra.mxu0 0.0
        %948 = vmatpush.msra.mxu0 0.0
        %949 = vmatpush.msra.mxu0 0.0
        %950 = vmatpush.msra.mxu0 0.0
        %951 = vmatpush.msra.mxu0 0.0
        %952 = vmatpush.msra.mxu0 0.0
        %953 = vmatpush.msra.mxu0 0.0
        %954 = vmatpush.msra.mxu0 0.0
        %955 = vmatpush.msra.mxu0 %v893
        %956 = vmatmul.f32.gmra.mxu0 %v936
        %v957 = vpop.f32.mrf.mxu0
        %v958 = vadd.f32 0.0, %v957
        %959 = vmatmul.f32.gmra.mxu0 %v938
        %v960 = vpop.f32.mrf.mxu0
        %v961 = vadd.f32 0.0, %v960
        %962 = vdwg.mxu0
        %v963 = vadd.f32 %v925, %v958
        %v964 = vadd.f32 %v928, %v961
        %v965 = vrot.slane %v891, 1
        %v966 = vrot.slane %v892, 1
        %v967 = vsel %vm799, %v965, %v966
        %v969 = vsel %vm799, %v966, 0.0
        %v970 = vsel %vm900, %v967, 0
        %v973 = vsel %vm900, %v969, 0
        %975 = vmatpush.msra.mxu0 0.0
        %976 = vmatpush.msra.mxu0 0.0
        %977 = vmatpush.msra.mxu0 0.0
        %978 = vmatpush.msra.mxu0 0.0
        %979 = vmatpush.msra.mxu0 0.0
        %980 = vmatpush.msra.mxu0 0.0
        %981 = vmatpush.msra.mxu0 0.0
        %982 = vmatpush.msra.mxu0 0.0
        %983 = vmatpush.msra.mxu0 0.0
        %984 = vmatpush.msra.mxu0 0.0
        %985 = vmatpush.msra.mxu0 0.0
        %986 = vmatpush.msra.mxu0 0.0
        %987 = vmatpush.msra.mxu0 0.0
        %988 = vmatpush.msra.mxu0 0.0
        %989 = vmatpush.msra.mxu0 0.0
        %990 = vmatpush.msra.mxu0 %v895
        %991 = vmatmul.f32.gmra.mxu0 %v970
        %v992 = vpop.f32.mrf.mxu0
        %v993 = vadd.f32 0.0, %v992
        %994 = vmatmul.f32.gmra.mxu0 %v973
        %v995 = vpop.f32.mrf.mxu0
        %v996 = vadd.f32 0.0, %v995
        %997 = vdwg.mxu0
        %v998 = vadd.f32 %v963, %v993
        %v999 = vadd.f32 %v964, %v996
        %v1000 = vld [vmem:[#allocation13] sm:$0xff]
        %v1001 = vld [vmem:[#allocation14] sm:$0x1]
        %v1003 = vperm.slane %v1001, 0
        %v1006 = vsel %vm900, %v998, 0
        %v1009 = vsel %vm900, %v999, 0
        %1011 = vmatpush.msra.mxu0 0.0
        %1012 = vmatpush.msra.mxu0 0.0
        %1013 = vmatpush.msra.mxu0 0.0
        %1014 = vmatpush.msra.mxu0 0.0
        %1015 = vmatpush.msra.mxu0 0.0
        %1016 = vmatpush.msra.mxu0 0.0
        %1017 = vmatpush.msra.mxu0 0.0
        %1018 = vmatpush.msra.mxu0 0.0
        %1019 = vmatpush.msra.mxu0 0.0
        %1020 = vmatpush.msra.mxu0 0.0
        %1021 = vmatpush.msra.mxu0 0.0
        %1022 = vmatpush.msra.mxu0 0.0
        %1023 = vmatpush.msra.mxu0 0.0
        %1024 = vmatpush.msra.mxu0 0.0
        %1025 = vmatpush.msra.mxu0 0.0
        %1026 = vmatpush.msra.mxu0 %v1000
        %1027 = vmatmul.f32.gmra.mxu0 %v1006
        %v1028 = vpop.f32.mrf.mxu0
        %v1029 = vadd.f32 %v1003, %v1028
        %1030 = vmatmul.f32.gmra.mxu0 %v1009
        %v1031 = vpop.f32.mrf.mxu0
        %v1032 = vadd.f32 %v1003, %v1031
        %1033 = vdwg.mxu0
        %v1034 = vmul.f32 %v1029, 0.5
        %v1035 = vmul.f32 %v1032, 0.5
        %v1036 = vmul.f32 %v1029, 0.044715
        %v1037 = vmul.f32 %v1032, 0.044715
        %v1038 = vmul.f32 %v1036, %v1029
        %v1039 = vmul.f32 %v1037, %v1032
        %v1040 = vmul.f32 %v1038, %v1029
        %v1041 = vmul.f32 %v1039, %v1032
        %v1042 = vadd.f32 %v1029, %v1040
        %v1043 = vadd.f32 %v1032, %v1041
        %v1044 = vmul.f32 %v1042, 0.7978846
        %v1045 = vmul.f32 %v1043, 0.7978846
        %v1046 = vtanh.pop %v1044
        %v1047 = vtanh.pop %v1045
        %v1048 = vadd.f32 %v1046, 1.0
        %v1049 = vadd.f32 %v1047, 1.0
        %v1050 = vmul.f32 %v1034, %v1048
        %v1051 = vmul.f32 %v1035, %v1049
        %v1052 = vld [vmem:[%s9] sm:$0xff]
        %v1053 = vld [vmem:[%s9 + $0x8] sm:$0xff]
        %v1054 = vld [vmem:[%s9 + $0x10] sm:$0xff]
        %v1055 = vld [vmem:[%s9 + $0x18] sm:$0xff]
        %v1056 = vld [vmem:[%s9 + $0x20] sm:$0xff]
        %v1057 = vld [vmem:[%s9 + $0x28] sm:$0xff]
        %v1058 = vld [vmem:[%s10] sm:$0x1]
        %v1060 = vperm.slane %v1058, 0
        %vm1062 = vcmask 130048
        %v1064 = vsel %vm1062, %v1050, 0
        %v1067 = vsel %vm1062, %v1051, 0
        %1069 = vmatpush.msra.mxu0 0.0
        %1070 = vmatpush.msra.mxu0 0.0
        %1071 = vmatpush.msra.mxu0 0.0
        %1072 = vmatpush.msra.mxu0 0.0
        %1073 = vmatpush.msra.mxu0 0.0
        %1074 = vmatpush.msra.mxu0 0.0
        %1075 = vmatpush.msra.mxu0 0.0
        %1076 = vmatpush.msra.mxu0 0.0
        %1077 = vmatpush.msra.mxu0 0.0
        %1078 = vmatpush.msra.mxu0 0.0
        %1079 = vmatpush.msra.mxu0 0.0
        %1080 = vmatpush.msra.mxu0 0.0
        %1081 = vmatpush.msra.mxu0 0.0
        %1082 = vmatpush.msra.mxu0 0.0
        %1083 = vmatpush.msra.mxu0 %v1055
        %1084 = vmatpush.msra.mxu0 %v1054
        %1085 = vmatmul.f32.gmra.mxu0 %v1064
        %v1086 = vpop.f32.mrf.mxu0
        %v1087 = vadd.f32 %v1060, %v1086
        %1088 = vmatmul.f32.gmra.mxu0 %v1067
        %v1089 = vpop.f32.mrf.mxu0
        %v1090 = vadd.f32 %v1060, %v1089
        %1091 = vdwg.mxu0
        %v1092 = vrot.slane %v1050, 7
        %v1093 = vrot.slane %v1051, 7
        %v1094 = vsel %vm760, %v1092, %v1093
        %v1096 = vsel %vm760, 0.0, %v1092
        %v1098 = vsel %vm1062, %v1096, 0
        %v1100 = vsel %vm1062, %v1094, 0
        %1102 = vmatpush.msra.mxu0 0.0
        %1103 = vmatpush.msra.mxu0 0.0
        %1104 = vmatpush.msra.mxu0 0.0
        %1105 = vmatpush.msra.mxu0 0.0
        %1106 = vmatpush.msra.mxu0 0.0
        %1107 = vmatpush.msra.mxu0 0.0
        %1108 = vmatpush.msra.mxu0 0.0
        %1109 = vmatpush.msra.mxu0 0.0
        %1110 = vmatpush.msra.mxu0 0.0
        %1111 = vmatpush.msra.mxu0 0.0
        %1112 = vmatpush.msra.mxu0 0.0
        %1113 = vmatpush.msra.mxu0 0.0
        %1114 = vmatpush.msra.mxu0 0.0
        %1115 = vmatpush.msra.mxu0 0.0
        %1116 = vmatpush.msra.mxu0 %v1053
        %1117 = vmatpush.msra.mxu0 %v1052
        %1118 = vmatmul.f32.gmra.mxu0 %v1098
        %v1119 = vpop.f32.mrf.mxu0
        %v1120 = vadd.f32 0.0, %v1119
        %1121 = vmatmul.f32.gmra.mxu0 %v1100
        %v1122 = vpop.f32.mrf.mxu0
        %v1123 = vadd.f32 0.0, %v1122
        %1124 = vdwg.mxu0
        %v1125 = vadd.f32 %v1087, %v1120
        %v1126 = vadd.f32 %v1090, %v1123
        %v1127 = vrot.slane %v1050, 1
        %v1128 = vrot.slane %v1051, 1
        %v1129 = vsel %vm799, %v1127, %v1128
        %v1131 = vsel %vm799, %v1128, 0.0
        %v1132 = vsel %vm1062, %v1129, 0
        %v1135 = vsel %vm1062, %v1131, 0
        %1137 = vmatpush.msra.mxu0 0.0
        %1138 = vmatpush.msra.mxu0 0.0
        %1139 = vmatpush.msra.mxu0 0.0
        %1140 = vmatpush.msra.mxu0 0.0
        %1141 = vmatpush.msra.mxu0 0.0
        %1142 = vmatpush.msra.mxu0 0.0
        %1143 = vmatpush.msra.mxu0 0.0
        %1144 = vmatpush.msra.mxu0 0.0
        %1145 = vmatpush.msra.mxu0 0.0
        %1146 = vmatpush.msra.mxu0 0.0
        %1147 = vmatpush.msra.mxu0 0.0
        %1148 = vmatpush.msra.mxu0 0.0
        %1149 = vmatpush.msra.mxu0 0.0
        %1150 = vmatpush.msra.mxu0 0.0
        %1151 = vmatpush.msra.mxu0 %v1057
        %1152 = vmatpush.msra.mxu0 %v1056
        %1153 = vmatmul.f32.gmra.mxu0 %v1132
        %v1154 = vpop.f32.mrf.mxu0
        %v1155 = vadd.f32 0.0, %v1154
        %1156 = vmatmul.f32.gmra.mxu0 %v1135
        %v1157 = vpop.f32.mrf.mxu0
        %v1158 = vadd.f32 0.0, %v1157
        %1159 = vdwg.mxu0
        %v1160 = vadd.f32 %v1125, %v1155
        %v1161 = vadd.f32 %v1126, %v1158
        %v1162 = vld [vmem:[#allocation16] sm:$0xff]
        %v1163 = vld [vmem:[#allocation16 + $0x8] sm:$0xff]
        %v1164 = vld [vmem:[%s12] sm:$0x1]
        %v1166 = vperm.slane %v1164, 0
        %v1169 = vsel %vm1062, %v1160, 0
        %v1172 = vsel %vm1062, %v1161, 0
        %1174 = vmatpush.msra.mxu0 0.0
        %1175 = vmatpush.msra.mxu0 0.0
        %1176 = vmatpush.msra.mxu0 0.0
        %1177 = vmatpush.msra.mxu0 0.0
        %1178 = vmatpush.msra.mxu0 0.0
        %1179 = vmatpush.msra.mxu0 0.0
        %1180 = vmatpush.msra.mxu0 0.0
        %1181 = vmatpush.msra.mxu0 0.0
        %1182 = vmatpush.msra.mxu0 0.0
        %1183 = vmatpush.msra.mxu0 0.0
        %1184 = vmatpush.msra.mxu0 0.0
        %1185 = vmatpush.msra.mxu0 0.0
        %1186 = vmatpush.msra.mxu0 0.0
        %1187 = vmatpush.msra.mxu0 0.0
        %1188 = vmatpush.msra.mxu0 %v1163
        %1189 = vmatpush.msra.mxu0 %v1162
        %1190 = vmatmul.f32.gmra.mxu0 %v1169
        %v1191 = vpop.f32.mrf.mxu0
        %v1192 = vadd.f32 %v1166, %v1191
        %1193 = vmatmul.f32.gmra.mxu0 %v1172
        %v1194 = vpop.f32.mrf.mxu0
        %v1195 = vadd.f32 %v1166, %v1194
        %1196 = vdwg.mxu0
        %v1197 = vmul.f32 %v1192, 0.5
        %v1198 = vmul.f32 %v1195, 0.5
        %v1199 = vmul.f32 %v1192, 0.044715
        %v1200 = vmul.f32 %v1195, 0.044715
        %v1201 = vmul.f32 %v1199, %v1192
        %v1202 = vmul.f32 %v1200, %v1195
        %v1203 = vmul.f32 %v1201, %v1192
        %v1204 = vmul.f32 %v1202, %v1195
        %v1205 = vadd.f32 %v1192, %v1203
        %v1206 = vadd.f32 %v1195, %v1204
        %v1207 = vmul.f32 %v1205, 0.7978846
        %v1208 = vmul.f32 %v1206, 0.7978846
        %v1209 = vtanh.pop %v1207
        %v1210 = vtanh.pop %v1208
        %v1211 = vadd.f32 %v1209, 1.0
        %v1212 = vadd.f32 %v1210, 1.0
        %v1213 = vmul.f32 %v1197, %v1211
        %v1214 = vmul.f32 %v1198, %v1212
        %v1215 = vld [vmem:[#allocation17] sm:$0xff]
        %v1216 = vld [vmem:[#allocation17 + $0x8] sm:$0xff]
        %v1217 = vld [vmem:[#allocation17 + $0x10] sm:$0xff]
        %v1218 = vld [vmem:[#allocation17 + $0x18] sm:$0xff]
        %v1219 = vld [vmem:[#allocation17 + $0x20] sm:$0xff]
        %v1220 = vld [vmem:[#allocation17 + $0x28] sm:$0xff]
        %v1221 = vld [vmem:[%s14] sm:$0x1]
        %v1223 = vperm.slane %v1221, 0
        %v1226 = vsel %vm1062, %v1213, 0
        %v1229 = vsel %vm1062, %v1214, 0
        %1231 = vmatpush.msra.mxu0 0.0
        %1232 = vmatpush.msra.mxu0 0.0
        %1233 = vmatpush.msra.mxu0 0.0
        %1234 = vmatpush.msra.mxu0 0.0
        %1235 = vmatpush.msra.mxu0 0.0
        %1236 = vmatpush.msra.mxu0 0.0
        %1237 = vmatpush.msra.mxu0 0.0
        %1238 = vmatpush.msra.mxu0 0.0
        %1239 = vmatpush.msra.mxu0 0.0
        %1240 = vmatpush.msra.mxu0 0.0
        %1241 = vmatpush.msra.mxu0 0.0
        %1242 = vmatpush.msra.mxu0 0.0
        %1243 = vmatpush.msra.mxu0 0.0
        %1244 = vmatpush.msra.mxu0 0.0
        %1245 = vmatpush.msra.mxu0 %v1218
        %1246 = vmatpush.msra.mxu0 %v1217
        %1247 = vmatmul.f32.gmra.mxu0 %v1226
        %v1248 = vpop.f32.mrf.mxu0
        %v1249 = vadd.f32 %v1223, %v1248
        %1250 = vmatmul.f32.gmra.mxu0 %v1229
        %v1251 = vpop.f32.mrf.mxu0
        %v1252 = vadd.f32 %v1223, %v1251
        %1253 = vdwg.mxu0
        %v1254 = vrot.slane %v1213, 7
        %v1255 = vrot.slane %v1214, 7
        %v1256 = vsel %vm760, %v1254, %v1255
        %v1258 = vsel %vm760, 0.0, %v1254
        %v1260 = vsel %vm1062, %v1258, 0
        %v1262 = vsel %vm1062, %v1256, 0
        %1264 = vmatpush.msra.mxu0 0.0
        %1265 = vmatpush.msra.mxu0 0.0
        %1266 = vmatpush.msra.mxu0 0.0
        %1267 = vmatpush.msra.mxu0 0.0
        %1268 = vmatpush.msra.mxu0 0.0
        %1269 = vmatpush.msra.mxu0 0.0
        %1270 = vmatpush.msra.mxu0 0.0
        %1271 = vmatpush.msra.mxu0 0.0
        %1272 = vmatpush.msra.mxu0 0.0
        %1273 = vmatpush.msra.mxu0 0.0
        %1274 = vmatpush.msra.mxu0 0.0
        %1275 = vmatpush.msra.mxu0 0.0
        %1276 = vmatpush.msra.mxu0 0.0
        %1277 = vmatpush.msra.mxu0 0.0
        %1278 = vmatpush.msra.mxu0 %v1216
        %1279 = vmatpush.msra.mxu0 %v1215
        %1280 = vmatmul.f32.gmra.mxu0 %v1260
        %v1281 = vpop.f32.mrf.mxu0
        %v1282 = vadd.f32 0.0, %v1281
        %1283 = vmatmul.f32.gmra.mxu0 %v1262
        %v1284 = vpop.f32.mrf.mxu0
        %v1285 = vadd.f32 0.0, %v1284
        %1286 = vdwg.mxu0
        %v1287 = vadd.f32 %v1249, %v1282
        %v1288 = vadd.f32 %v1252, %v1285
        %v1289 = vrot.slane %v1213, 1
        %v1290 = vrot.slane %v1214, 1
        %v1291 = vsel %vm799, %v1289, %v1290
        %v1293 = vsel %vm799, %v1290, 0.0
        %v1294 = vsel %vm1062, %v1291, 0
        %v1297 = vsel %vm1062, %v1293, 0
        %1299 = vmatpush.msra.mxu0 0.0
        %1300 = vmatpush.msra.mxu0 0.0
        %1301 = vmatpush.msra.mxu0 0.0
        %1302 = vmatpush.msra.mxu0 0.0
        %1303 = vmatpush.msra.mxu0 0.0
        %1304 = vmatpush.msra.mxu0 0.0
        %1305 = vmatpush.msra.mxu0 0.0
        %1306 = vmatpush.msra.mxu0 0.0
        %1307 = vmatpush.msra.mxu0 0.0
        %1308 = vmatpush.msra.mxu0 0.0
        %1309 = vmatpush.msra.mxu0 0.0
        %1310 = vmatpush.msra.mxu0 0.0
        %1311 = vmatpush.msra.mxu0 0.0
        %1312 = vmatpush.msra.mxu0 0.0
        %1313 = vmatpush.msra.mxu0 %v1220
        %1314 = vmatpush.msra.mxu0 %v1219
        %1315 = vmatmul.f32.gmra.mxu0 %v1294
        %v1316 = vpop.f32.mrf.mxu0
        %v1317 = vadd.f32 0.0, %v1316
        %1318 = vmatmul.f32.gmra.mxu0 %v1297
        %v1319 = vpop.f32.mrf.mxu0
        %v1320 = vadd.f32 0.0, %v1319
        %1321 = vdwg.mxu0
        %v1322 = vadd.f32 %v1287, %v1317
        %v1323 = vadd.f32 %v1288, %v1320
        %v1324 = vld [vmem:[#allocation19] sm:$0xff]
        %v1325 = vld [vmem:[#allocation19 + $0x8] sm:$0xff]
        %v1326 = vld [vmem:[#allocation19 + $0x10] sm:$0xff]
        %v1327 = vld [vmem:[#allocation19 + $0x18] sm:$0xff]
        %v1328 = vld [vmem:[#allocation19 + $0x20] sm:$0xff]
        %v1329 = vld [vmem:[#allocation19 + $0x28] sm:$0xff]
        %v1330 = vld [vmem:[%s16] sm:$0x1]
        %v1332 = vperm.slane %v1330, 0
        %v1335 = vsel %vm1062, %v1322, 0
        %v1338 = vsel %vm1062, %v1323, 0
        %1340 = vmatpush.msra.mxu0 0.0
        %1341 = vmatpush.msra.mxu0 0.0
        %1342 = vmatpush.msra.mxu0 0.0
        %1343 = vmatpush.msra.mxu0 0.0
        %1344 = vmatpush.msra.mxu0 0.0
        %1345 = vmatpush.msra.mxu0 0.0
        %1346 = vmatpush.msra.mxu0 0.0
        %1347 = vmatpush.msra.mxu0 0.0
        %1348 = vmatpush.msra.mxu0 0.0
        %1349 = vmatpush.msra.mxu0 0.0
        %1350 = vmatpush.msra.mxu0 0.0
        %1351 = vmatpush.msra.mxu0 0.0
        %1352 = vmatpush.msra.mxu0 0.0
        %1353 = vmatpush.msra.mxu0 0.0
        %1354 = vmatpush.msra.mxu0 %v1327
        %1355 = vmatpush.msra.mxu0 %v1326
        %1356 = vmatmul.f32.gmra.mxu0 %v1335
        %v1357 = vpop.f32.mrf.mxu0
        %v1358 = vadd.f32 %v1332, %v1357
        %1359 = vmatmul.f32.gmra.mxu0 %v1338
        %v1360 = vpop.f32.mrf.mxu0
        %v1361 = vadd.f32 %v1332, %v1360
        %1362 = vdwg.mxu0
        %v1363 = vrot.slane %v1322, 7
        %v1364 = vrot.slane %v1323, 7
        %v1365 = vsel %vm760, %v1363, %v1364
        %v1367 = vsel %vm760, 0.0, %v1363
        %v1369 = vsel %vm1062, %v1367, 0
        %v1371 = vsel %vm1062, %v1365, 0
        %1373 = vmatpush.msra.mxu0 0.0
        %1374 = vmatpush.msra.mxu0 0.0
        %1375 = vmatpush.msra.mxu0 0.0
        %1376 = vmatpush.msra.mxu0 0.0
        %1377 = vmatpush.msra.mxu0 0.0
        %1378 = vmatpush.msra.mxu0 0.0
        %1379 = vmatpush.msra.mxu0 0.0
        %1380 = vmatpush.msra.mxu0 0.0
        %1381 = vmatpush.msra.mxu0 0.0
        %1382 = vmatpush.msra.mxu0 0.0
        %1383 = vmatpush.msra.mxu0 0.0
        %1384 = vmatpush.msra.mxu0 0.0
        %1385 = vmatpush.msra.mxu0 0.0
        %1386 = vmatpush.msra.mxu0 0.0
        %1387 = vmatpush.msra.mxu0 %v1325
        %1388 = vmatpush.msra.mxu0 %v1324
        %1389 = vmatmul.f32.gmra.mxu0 %v1369
        %v1390 = vpop.f32.mrf.mxu0
        %v1391 = vadd.f32 0.0, %v1390
        %1392 = vmatmul.f32.gmra.mxu0 %v1371
        %v1393 = vpop.f32.mrf.mxu0
        %v1394 = vadd.f32 0.0, %v1393
        %1395 = vdwg.mxu0
        %v1396 = vadd.f32 %v1358, %v1391
        %v1397 = vadd.f32 %v1361, %v1394
        %v1398 = vrot.slane %v1322, 1
        %v1399 = vrot.slane %v1323, 1
        %v1400 = vsel %vm799, %v1398, %v1399
        %v1402 = vsel %vm799, %v1399, 0.0
        %v1403 = vsel %vm1062, %v1400, 0
        %v1406 = vsel %vm1062, %v1402, 0
        %1408 = vmatpush.msra.mxu0 0.0
        %1409 = vmatpush.msra.mxu0 0.0
        %1410 = vmatpush.msra.mxu0 0.0
        %1411 = vmatpush.msra.mxu0 0.0
        %1412 = vmatpush.msra.mxu0 0.0
        %1413 = vmatpush.msra.mxu0 0.0
        %1414 = vmatpush.msra.mxu0 0.0
        %1415 = vmatpush.msra.mxu0 0.0
        %1416 = vmatpush.msra.mxu0 0.0
        %1417 = vmatpush.msra.mxu0 0.0
        %1418 = vmatpush.msra.mxu0 0.0
        %1419 = vmatpush.msra.mxu0 0.0
        %1420 = vmatpush.msra.mxu0 0.0
        %1421 = vmatpush.msra.mxu0 0.0
        %1422 = vmatpush.msra.mxu0 %v1329
        %1423 = vmatpush.msra.mxu0 %v1328
        %1424 = vmatmul.f32.gmra.mxu0 %v1403
        %v1425 = vpop.f32.mrf.mxu0
        %v1426 = vadd.f32 0.0, %v1425
        %1427 = vmatmul.f32.gmra.mxu0 %v1406
        %v1428 = vpop.f32.mrf.mxu0
        %v1429 = vadd.f32 0.0, %v1428
        %1430 = vdwg.mxu0
        %v1431 = vadd.f32 %v1396, %v1426
        %v1432 = vadd.f32 %v1397, %v1429
        %v1433 = vmul.f32 %v1431, 0.5
        %v1434 = vmul.f32 %v1432, 0.5
        %v1435 = vmul.f32 %v1431, 0.044715
        %v1436 = vmul.f32 %v1432, 0.044715
        %v1437 = vmul.f32 %v1435, %v1431
        %v1438 = vmul.f32 %v1436, %v1432
        %v1439 = vmul.f32 %v1437, %v1431
        %v1440 = vmul.f32 %v1438, %v1432
        %v1441 = vadd.f32 %v1431, %v1439
        %v1442 = vadd.f32 %v1432, %v1440
        %v1443 = vmul.f32 %v1441, 0.7978846
        %v1444 = vmul.f32 %v1442, 0.7978846
        %v1445 = vtanh.pop %v1443
        %v1446 = vtanh.pop %v1444
        %v1447 = vadd.f32 %v1445, 1.0
        %v1448 = vadd.f32 %v1446, 1.0
        %v1449 = vmul.f32 %v1433, %v1447
        %v1450 = vmul.f32 %v1434, %v1448
        %vm1451 = vcmask 261120
        %1452 = vst.msk [vmem:[%s711] sm:$0xff] %vm1451, %v1449
        %1453 = vst.msk [vmem:[%s711 + $0x8] sm:$0xff] %vm1451, %v1450
        %s1454 = sand.u32 %s407, 1
        %s1455 = scalar_lea.sflag [#allocation4], %s1454
        %s1456 = sand.u32 %s407, 1
        %s1457 = smul.addr %s1456, 16
        %s1458 = scalar_lea.vmem [#allocation20], %s1457
        // Predicated region
        $region133: #{tpu_custom_call.1} parent=87 // pred_check
          %p1459 = pneg %p417
        $region134: #{tpu_custom_call.1} parent=87 // pred_check_branch
          %1461 = sbr.rel (%p1459) target = $region136
        $region135: #{tpu_custom_call.1} parent=87 // pred_region
          %1463 = vsyncadd %s1455, 0
          %s1464 = smul.addr %s37, 2
          %s1465 = smul.addr %s1464, 8
          %s1466 = scalar_lea.hbm %s17, %s1465
          %s1467 = sshll.u32 %s1458, 4
          %s1468 = int_to_ptr.vmem [resolvable:$true] %s1467
          %s1469 = sshll.u32 %s1466, 4
          %s1470 = int_to_ptr.hbm [resolvable:$true] %s1469
          %1475 = dma.vmem_to_hbm [thread:$0]  %s1468, 256, %s1470, %s1455, 128, 128, 8
        $region136: #{tpu_custom_call.1} parent=87 // pred_fallthru
          _
      $region88: #{tpu_custom_call.1} parent=5 // pred_fallthru
        _
      %p1476 = scmp.le.s32.totalorder 2, %s32
      // Predicated region
      $region137: #{tpu_custom_call.1} parent=5 // pred_check
        %p1477 = pneg %p1476
      $region138: #{tpu_custom_call.1} parent=5 // pred_check_branch
        %1479 = sbr.rel (%p1477) target = $region140
      $region139: #{tpu_custom_call.1} parent=5 // pred_region
        %s1480 = ssub.s32 %s32, 2
        // Predicated region
        $region141: #{tpu_custom_call.1} parent=139 // pred_check
          %p1481 = pneg %p423
        $region142: #{tpu_custom_call.1} parent=139 // pred_check_branch
          %1483 = sbr.rel (%p1481) target = $region144
        $region143: #{tpu_custom_call.1} parent=139 // pred_region
          %s1484 = sand.u32 %s408, 1
          %s1485 = scalar_lea.sflag [#allocation4], %s1484
          %s1486 = sand.u32 %s408, 1
          %s1487 = smul.addr %s1486, 16
          %s1488 = scalar_lea.vmem [#allocation20], %s1487
          %1490 = dma.done %s1485, 256
        $region144: #{tpu_custom_call.1} parent=139 // pred_fallthru
          _
      $region140: #{tpu_custom_call.1} parent=5 // pred_fallthru
        _
    $region6: #{tpu_custom_call.1} parent=1 // loop_footer
      %s36 = sadd.s32 1, %s32
    $region7: #{tpu_custom_call.1} parent=1 // loop_footer_branch
      %31 = sbr.rel target = $region3
    $region8: #{tpu_custom_call.1} parent=1 // loop_exit
      _
    %1491 = vsyncpa [#allocation3], 1
    %s1492 = scalar_lea.sflag [#allocation3], 1
    %1493 = vsyncpa %s1492, 1
    %1494 = vsyncpa [#allocation6], 1
    %1495 = vsyncpa [#allocation9], 1
    %1496 = vsyncpa [#allocation12], 1
    %1497 = vsyncpa [#allocation15], 1
    %1498 = vsyncpa [#allocation18], 1
    %1499 = vsyncpa [#allocation4], 1
    %s1500 = scalar_lea.sflag [#allocation4], 1
    %1501 = vsyncpa %s1500, 1

</llo_original>
